<compile_context>
chip_gen: v5e
topology: v5e:2x2
jax: 0.10.0
libtpu: 0.0.40
codegen_flags: <defaults>
</compile_context>

<pallas_src>
import functools
import math

import numpy as np
import jax
import jax.numpy as jnp
from jax.experimental import pallas as pl
from jax.experimental.pallas import tpu as pltpu


_VMEM_LIMIT = 48 * 1024 * 1024  # safe on v5e/v6e (128 MiB) and v7x (64 MiB) physical VMEM


# ----------------------------------------------------------------------------
# small helpers
# ----------------------------------------------------------------------------
def _round_up(x, m):
    return ((x + m - 1) // m) * m


def _tile(dim, target):
    """Return (tile, padded_dim). Full block when small, `target` tile otherwise."""
    if dim <= target:
        return dim, dim
    return target, _round_up(dim, target)


def _pad2(a, rows, cols):
    r, c = a.shape
    if r == rows and c == cols:
        return a
    return jnp.pad(a, ((0, rows - r), (0, cols - c)))


# ----------------------------------------------------------------------------
# Pallas kernels
# ----------------------------------------------------------------------------
def _linear_kernel(*refs, activation, use_mask):
    """Tiled y = x @ w + b (optional ReLU, optional per-row keep-mask)."""
    if use_mask:
        x_ref, w_ref, b_ref, m_ref, o_ref, acc_ref = refs
    else:
        x_ref, w_ref, b_ref, o_ref, acc_ref = refs

    @pl.when(pl.program_id(2) == 0)
    def _():
        acc_ref[...] = jnp.zeros_like(acc_ref)

    acc_ref[...] += jnp.dot(x_ref[...], w_ref[...],
                            preferred_element_type=jnp.float32)

    @pl.when(pl.program_id(2) == pl.num_programs(2) - 1)
    def _():
        y = acc_ref[...] + b_ref[...].astype(jnp.float32)
        if activation == "relu":
            y = jnp.maximum(y, 0.0)
        if use_mask:
            y = y * m_ref[...]
        o_ref[...] = y.astype(o_ref.dtype)


def pallas_linear(x, w, b, *, activation=None, out_dtype=jnp.bfloat16,
                  row_mask=None, lane_pad_n=False):
    """Tiled (M,K)x(K,N) matmul. Pads M/N/K to tile multiples, slices result back."""
    M, K = x.shape
    Kw, N = w.shape
    assert K == Kw

    tm, Mp = _tile(M, 256)
    n_base = _round_up(N, 128) if lane_pad_n else N
    tn, Np = _tile(n_base, 256)
    tk, Kp = _tile(K, 512)

    xp = _pad2(x, Mp, Kp)
    wp = _pad2(w, Kp, Np)
    bp = _pad2(b.reshape(1, N).astype(jnp.float32), 1, Np)

    in_specs = [
        pl.BlockSpec((tm, tk), lambda i, j, k: (i, k)),
        pl.BlockSpec((tk, tn), lambda i, j, k: (k, j)),
        pl.BlockSpec((1, tn), lambda i, j, k: (0, j)),
    ]
    args = [xp, wp, bp]
    use_mask = row_mask is not None
    if use_mask:
        mp = _pad2(row_mask.reshape(M, 1).astype(jnp.float32), Mp, 1)
        in_specs.append(pl.BlockSpec((tm, 1), lambda i, j, k: (i, 0)))
        args.append(mp)

    kernel = functools.partial(_linear_kernel, activation=activation,
                               use_mask=use_mask)
    out = pl.pallas_call(
        kernel,
        out_shape=jax.ShapeDtypeStruct((Mp, Np), out_dtype),
        grid_spec=pltpu.PrefetchScalarGridSpec(
            num_scalar_prefetch=0,
            grid=(Mp // tm, Np // tn, Kp // tk),
            in_specs=in_specs,
            out_specs=pl.BlockSpec((tm, tn), lambda i, j, k: (i, j)),
            scratch_shapes=[pltpu.VMEM((tm, tn), jnp.float32)],
        ),
        compiler_params=pltpu.CompilerParams(
            dimension_semantics=("parallel", "parallel", "arbitrary"),
            vmem_limit_bytes=_VMEM_LIMIT),
    )(*args)
    return out[:M, :N]


def _proj_res_ln_kernel(attn_ref, x_ref, wo_ref, bo_ref, g_ref, b_ref, o_ref, *, eps):
    """h = LayerNorm(x + attn @ wo + bo) — fused output projection + residual + LN."""
    y = jnp.dot(attn_ref[...], wo_ref[...], preferred_element_type=jnp.float32)
    y = y + bo_ref[...] + x_ref[...].astype(jnp.float32)
    mu = jnp.mean(y, axis=-1, keepdims=True)
    var = jnp.mean(jnp.square(y - mu), axis=-1, keepdims=True)
    o_ref[...] = ((y - mu) * jax.lax.rsqrt(var + eps) * g_ref[...]
                  + b_ref[...]).astype(o_ref.dtype)


def pallas_attn_out_ln(attn2d, x2d, wo, bo, gamma, beta, eps=1e-5):
    M, D = attn2d.shape
    tm, Mp = _tile(M, 256)
    kernel = functools.partial(_proj_res_ln_kernel, eps=eps)
    out = pl.pallas_call(
        kernel,
        out_shape=jax.ShapeDtypeStruct((Mp, D), jnp.bfloat16),
        grid_spec=pltpu.PrefetchScalarGridSpec(
            num_scalar_prefetch=0,
            grid=(Mp // tm,),
            in_specs=[
                pl.BlockSpec((tm, D), lambda i: (i, 0)),
                pl.BlockSpec((tm, D), lambda i: (i, 0)),
                pl.BlockSpec((D, D), lambda i: (0, 0)),
                pl.BlockSpec((1, D), lambda i: (0, 0)),
                pl.BlockSpec((1, D), lambda i: (0, 0)),
                pl.BlockSpec((1, D), lambda i: (0, 0)),
            ],
            out_specs=pl.BlockSpec((tm, D), lambda i: (i, 0)),
        ),
        compiler_params=pltpu.CompilerParams(
            dimension_semantics=("parallel",),
            vmem_limit_bytes=_VMEM_LIMIT),
    )(_pad2(attn2d, Mp, D), _pad2(x2d, Mp, D), wo,
      bo.reshape(1, D).astype(jnp.float32),
      gamma.reshape(1, D).astype(jnp.float32),
      beta.reshape(1, D).astype(jnp.float32))
    return out[:M]


def _ffn_res_ln_kernel(h_ref, w1_ref, b1_ref, w2_ref, b2_ref, g_ref, b_ref, o_ref, *, eps):
    """out = LayerNorm(h + ReLU(h @ w1 + b1) @ w2 + b2). (tm, FFN) stays in VMEM."""
    h = h_ref[...]
    hf = h.astype(jnp.float32)
    z = jnp.dot(h, w1_ref[...], preferred_element_type=jnp.float32) + b1_ref[...]
    z = jnp.maximum(z, 0.0).astype(w2_ref.dtype)
    y = jnp.dot(z, w2_ref[...], preferred_element_type=jnp.float32) + b2_ref[...]
    y = y + hf
    mu = jnp.mean(y, axis=-1, keepdims=True)
    var = jnp.mean(jnp.square(y - mu), axis=-1, keepdims=True)
    o_ref[...] = ((y - mu) * jax.lax.rsqrt(var + eps) * g_ref[...]
                  + b_ref[...]).astype(o_ref.dtype)


def pallas_ffn_ln(h2d, w1, b1, w2, b2, gamma, beta, eps=1e-5):
    M, D = h2d.shape
    F = w1.shape[1]
    tm, Mp = _tile(M, 256)
    kernel = functools.partial(_ffn_res_ln_kernel, eps=eps)
    out = pl.pallas_call(
        kernel,
        out_shape=jax.ShapeDtypeStruct((Mp, D), jnp.bfloat16),
        grid_spec=pltpu.PrefetchScalarGridSpec(
            num_scalar_prefetch=0,
            grid=(Mp // tm,),
            in_specs=[
                pl.BlockSpec((tm, D), lambda i: (i, 0)),
                pl.BlockSpec((D, F), lambda i: (0, 0)),
                pl.BlockSpec((1, F), lambda i: (0, 0)),
                pl.BlockSpec((F, D), lambda i: (0, 0)),
                pl.BlockSpec((1, D), lambda i: (0, 0)),
                pl.BlockSpec((1, D), lambda i: (0, 0)),
                pl.BlockSpec((1, D), lambda i: (0, 0)),
            ],
            out_specs=pl.BlockSpec((tm, D), lambda i: (i, 0)),
        ),
        compiler_params=pltpu.CompilerParams(
            dimension_semantics=("parallel",),
            vmem_limit_bytes=_VMEM_LIMIT),
    )(_pad2(h2d, Mp, D), w1, b1.reshape(1, F).astype(jnp.float32),
      w2, b2.reshape(1, D).astype(jnp.float32),
      gamma.reshape(1, D).astype(jnp.float32),
      beta.reshape(1, D).astype(jnp.float32))
    return out[:M]


def _attention_kernel(fl_ref, q_ref, k_ref, v_ref, o_ref, *, scale):
    """All heads of one batch element; causal + key-padding mask built in-kernel."""
    b = pl.program_id(0)
    L = fl_ref[b]                         # valid length (text_len + acoustic_len)

    q = q_ref[0]                          # (H, T, Dh) bf16
    k = k_ref[0]
    v = v_ref[0]
    _, T, _ = q.shape

    row = jax.lax.broadcasted_iota(jnp.int32, (T, T), 0)
    col = jax.lax.broadcasted_iota(jnp.int32, (T, T), 1)
    masked = jnp.logical_or(col > row, col >= L)      # causal | key-padding
    bias = jnp.where(masked, -1e9, 0.0).astype(jnp.float32)

    # scores: contract last axes (no host-side K transpose); f32 MXU accumulation
    s = jnp.einsum('hqd,hkd->hqk', q, k,
                   preferred_element_type=jnp.float32) * scale
    s = s + bias[None, :, :]
    s = s - jnp.max(s, axis=-1, keepdims=True)
    p = jnp.exp(s)
    denom = jnp.sum(p, axis=-1, keepdims=True)
    p = p * pl.reciprocal(denom, approx=True)         # EUP, off the VALU path

    o = jnp.einsum('hqk,hkd->hqd', p.astype(v.dtype), v,
                   preferred_element_type=jnp.float32)

    # zero padded query rows (they would otherwise hold a uniform-softmax of garbage)
    qvalid = (jax.lax.broadcasted_iota(jnp.int32, (T, 1), 0) < L).astype(jnp.float32)
    o_ref[0] = (o * qvalid[None, :, :]).astype(o_ref.dtype)


def pallas_attention(q, k, v, full_len, scale):
    """q,k,v: (B, H, T, Dh) bf16; full_len: (B,) int32 scalar-prefetched to SMEM."""
    B, H, T, Dh = q.shape
    kernel = functools.partial(_attention_kernel, scale=scale)
    spec = pl.BlockSpec((1, H, T, Dh), lambda b, fl: (b, 0, 0, 0))
    # TODO(synk): for long sequences (T >~ 1024) switch to flash-style KV tiling
    # (online softmax) so VMEM stays O(T*Dh) instead of O(H*T^2).
    return pl.pallas_call(
        kernel,
        out_shape=jax.ShapeDtypeStruct((B, H, T, Dh), jnp.bfloat16),
        grid_spec=pltpu.PrefetchScalarGridSpec(
            num_scalar_prefetch=1,
            grid=(B,),
            in_specs=[spec, spec, spec],
            out_specs=spec,
        ),
        compiler_params=pltpu.CompilerParams(
            dimension_semantics=("parallel",),
            vmem_limit_bytes=_VMEM_LIMIT),
    )(full_len, q, k, v)


# ----------------------------------------------------------------------------
# model glue (plain JAX; hot paths above in Pallas)
# ----------------------------------------------------------------------------
def sinusoidal_pe(length, dim):
    pos = np.arange(length)[:, None].astype(np.float64)
    i = np.arange(dim // 2)[None, :].astype(np.float64)
    angle = pos / np.power(10000.0, 2.0 * i / dim)
    pe = np.zeros((length, dim), dtype=np.float64)
    pe[:, 0::2] = np.sin(angle)
    pe[:, 1::2] = np.cos(angle)
    return jnp.asarray(pe, jnp.float32)


def make_params(key, *, text_vocab, ac_vocab, d_model, n_heads, ffn, n_layers, out_features):
    ks = jax.random.split(key, 4 + n_layers)
    p = {}
    p["text_emb"] = 0.02 * jax.random.normal(ks[0], (text_vocab, d_model), jnp.float32)
    ac_emb = 0.02 * jax.random.normal(ks[1], (ac_vocab, d_model), jnp.float32)
    p["ac_emb"] = ac_emb.at[0].set(0.0)                     # padding_idx = 0
    p["out_w"] = (0.02 * jax.random.normal(ks[2], (d_model, out_features),
                                           jnp.float32)).astype(jnp.bfloat16)
    p["out_b"] = jnp.zeros((out_features,), jnp.float32)
    layers = []
    for li in range(n_layers):
        lk = jax.random.split(ks[4 + li], 6)
        wq = 0.02 * jax.random.normal(lk[0], (d_model, d_model), jnp.float32)
        wk = 0.02 * jax.random.normal(lk[1], (d_model, d_model), jnp.float32)
        wv = 0.02 * jax.random.normal(lk[2], (d_model, d_model), jnp.float32)
        layer = {
            "wqkv": jnp.concatenate([wq, wk, wv], axis=1).astype(jnp.bfloat16),
            "bqkv": jnp.zeros((3 * d_model,), jnp.float32),
            "wo": (0.02 * jax.random.normal(lk[3], (d_model, d_model),
                                            jnp.float32)).astype(jnp.bfloat16),
            "bo": jnp.zeros((d_model,), jnp.float32),
            "w1": (0.02 * jax.random.normal(lk[4], (d_model, ffn),
                                            jnp.float32)).astype(jnp.bfloat16),
            "b1": jnp.zeros((ffn,), jnp.float32),
            "w2": (0.02 * jax.random.normal(lk[5], (ffn, d_model),
                                            jnp.float32)).astype(jnp.bfloat16),
            "b2": jnp.zeros((d_model,), jnp.float32),
            "ln1_g": jnp.ones((d_model,), jnp.float32),
            "ln1_b": jnp.zeros((d_model,), jnp.float32),
            "ln2_g": jnp.ones((d_model,), jnp.float32),
            "ln2_b": jnp.zeros((d_model,), jnp.float32),
        }
        layers.append(layer)
    p["layers"] = layers
    return p


def transformer_layer(x, lp, full_len, n_heads):
    """Post-LN encoder layer (nn.TransformerEncoderLayer defaults, ReLU, no dropout)."""
    B, T, D = x.shape
    Dh = D // n_heads
    x2 = x.reshape(B * T, D)

    # fused QKV projection -> (B*T, 3D)
    qkv = pallas_linear(x2, lp["wqkv"], lp["bqkv"])
    qkv = qkv.reshape(B, T, 3, n_heads, Dh).transpose(2, 0, 3, 1, 4)  # (3,B,H,T,Dh)
    q, k, v = qkv[0], qkv[1], qkv[2]

    attn = pallas_attention(q, k, v, full_len, 1.0 / math.sqrt(Dh))    # (B,H,T,Dh)
    attn2 = attn.transpose(0, 2, 1, 3).reshape(B * T, D)

    # fused wo-proj + residual + LN1
    h = pallas_attn_out_ln(attn2, x2, lp["wo"], lp["bo"], lp["ln1_g"], lp["ln1_b"])
    # fused FFN (w1+ReLU+w2) + residual + LN2
    out = pallas_ffn_ln(h, lp["w1"], lp["b1"], lp["w2"], lp["b2"],
                        lp["ln2_g"], lp["ln2_b"])
    return out.reshape(B, T, D)


def cat_features(x_text, x_ac, text_lens, ac_lens):
    """Per-batch [text[:lt]; acoustic[:la]] then right-pad, via a single gather."""
    # TODO(synk): lengths are host-static Python ints (mirrors torch .item()); each
    # distinct length tuple retraces. A dynamic version would prefetch offsets to SMEM.
    B, Lt, D = x_text.shape
    La = x_ac.shape[1]
    T = max(tl + al for tl, al in zip(text_lens, ac_lens))
    src = jnp.concatenate([x_text, x_ac, jnp.zeros((B, 1, D), x_text.dtype)], axis=1)
    idx = np.full((B, T), Lt + La, dtype=np.int32)          # default -> zero row
    for b in range(B):
        tl, al = text_lens[b], ac_lens[b]
        idx[b, :tl] = np.arange(tl)
        idx[b, tl:tl + al] = Lt + np.arange(al)
    return jnp.take_along_axis(src, jnp.asarray(idx)[:, :, None], axis=1)


def split_acoustic(x, text_lens, ac_lens):
    """x[b, lt-1 : lt-1+la] per batch, right-padded to max(la), via a single gather."""
    B, T, D = x.shape
    Am = max(ac_lens)
    src = jnp.concatenate([x, jnp.zeros((B, 1, D), x.dtype)], axis=1)  # zero row at T
    idx = np.full((B, Am), T, dtype=np.int32)
    for b in range(B):
        tl, al = text_lens[b], ac_lens[b]
        idx[b, :al] = (tl - 1) + np.arange(al)
    return jnp.take_along_axis(src, jnp.asarray(idx)[:, :, None], axis=1)


def valle_forward(params, text, acoustic, *, text_lens, ac_lens, n_heads):
    B, Lt = text.shape
    La = acoustic.shape[1]
    D = params["text_emb"].shape[1]

    # embeddings + positional encodings (f32), then bf16 activations for the decoder
    x_text = jnp.take(params["text_emb"], text, axis=0) + sinusoidal_pe(Lt, D)[None]
    x_ac = jnp.take(params["ac_emb"], acoustic, axis=0) + sinusoidal_pe(La, D)[None]

    x = cat_features(x_text, x_ac, text_lens, ac_lens).astype(jnp.bfloat16)
    B, T, _ = x.shape

    full_len = jnp.asarray([tl + al for tl, al in zip(text_lens, ac_lens)], jnp.int32)

    for lp in params["layers"]:
        x = transformer_layer(x, lp, full_len, n_heads)

    # split_features -> acoustic slice (shifted by one for AR alignment)
    x_acou = split_acoustic(x, text_lens, ac_lens)                     # (B, Am, D)
    Bm, Am, _ = x_acou.shape

    # out_proj + masked_fill fused; output lane-padded to 128 then sliced back
    apos = np.arange(Am)
    keep = jnp.asarray(
        (apos[None, :] < np.asarray(ac_lens)[:, None]).reshape(Bm * Am), jnp.float32)
    logit = pallas_linear(x_acou.reshape(Bm * Am, D), params["out_w"], params["out_b"],
                          out_dtype=jnp.float32, row_mask=keep, lane_pad_n=True)
    return logit.reshape(Bm, Am, -1)


# ----------------------------------------------------------------------------
if __name__ == "__main__":
    # small demo shapes
    B = 2
    Lt, La = 6, 8                        # max text / acoustic lengths
    D, H, FFN, LAYERS = 64, 4, 128, 2
    CODEBOOK = 7
    TEXT_VOCAB = 12
    AC_VOCAB = CODEBOOK + 2              # pad=0, eos=1, tokens...
    OUT_FEATURES = CODEBOOK + 1

    key = jax.random.PRNGKey(0)
    kp, kt, ka = jax.random.split(key, 3)
    params = make_params(kp, text_vocab=TEXT_VOCAB, ac_vocab=AC_VOCAB, d_model=D,
                         n_heads=H, ffn=FFN, n_layers=LAYERS, out_features=OUT_FEATURES)

    text_lens = (6, 4)                   # host-static lengths (torch uses .item())
    ac_lens = (8, 5)

    text = jax.random.randint(kt, (B, Lt), 2, TEXT_VOCAB, dtype=jnp.int32)
    acoustic = jax.random.randint(ka, (B, La), 2, AC_VOCAB, dtype=jnp.int32)
    # zero padded token positions (PAD idx = 0), like a real padded batch
    text = text * (jnp.arange(Lt)[None, :] < jnp.asarray(text_lens)[:, None])
    acoustic = acoustic * (jnp.arange(La)[None, :] < jnp.asarray(ac_lens)[:, None])

    fwd = jax.jit(functools.partial(valle_forward, text_lens=text_lens,
                                    ac_lens=ac_lens, n_heads=H))
    logit = jax.block_until_ready(fwd(params, text, acoustic))

    assert logit.shape == (B, max(ac_lens), OUT_FEATURES), logit.shape
    assert bool(jnp.all(jnp.isfinite(logit)))
    # padded acoustic frames must be zeroed (masked_fill semantics)
    assert bool(jnp.all(logit[1, ac_lens[1]:, :] == 0.0))
    print("KERNEL_OK")
</pallas_src>

<mosaic_0001>
module attributes {stable_mosaic.version = 11 : i64} {
  func.func @_linear_kernel(%arg0: i32, %arg1: i32, %arg2: i32, %arg3: memref<28x64xbf16, #tpu.memory_space<vmem>>, %arg4: memref<64x192xbf16, #tpu.memory_space<vmem>>, %arg5: memref<1x192xf32, #tpu.memory_space<vmem>>, %arg6: memref<28x192xbf16, #tpu.memory_space<vmem>>, %arg7: memref<28x192xf32, #tpu.memory_space<vmem>>) attributes {dimension_semantics = [#tpu.dimension_semantics<parallel>, #tpu.dimension_semantics<parallel>, #tpu.dimension_semantics<arbitrary>], iteration_bounds = array<i64: 1, 1, 1>, scalar_prefetch = 0 : i64, scratch_operands = 1 : i64, tpu.core_type = #tpu.core_type<tc>, window_params = [{transform_indices = @transform_0, window_bounds = array<i64: 28, 64>}, {transform_indices = @transform_1, window_bounds = array<i64: 64, 192>}, {transform_indices = @transform_2, window_bounds = array<i64: 1, 192>}, {transform_indices = @transform_3, window_bounds = array<i64: 28, 192>}]} {
    %c0_i32 = arith.constant 0 : i32
    %0 = arith.cmpi eq, %arg2, %c0_i32 : i32
    %1 = arith.extui %0 : i1 to i32
    %c0_i32_0 = arith.constant 0 : i32
    %2 = arith.cmpi ne, %1, %c0_i32_0 : i32
    scf.if %2 {
      %cst_10 = arith.constant 0.000000e+00 : f32
      %12 = vector.broadcast %cst_10 : f32 to vector<28x192xf32>
      %c0_11 = arith.constant 0 : index
      %c0_12 = arith.constant 0 : index
      %13 = vector.load %arg7[%c0_11, %c0_12] : memref<28x192xf32, #tpu.memory_space<vmem>>, vector<28x192xf32>
      tpu.vector_store %arg7[%c0_11, %c0_12], %12 {strides = array<i32>} : memref<28x192xf32, #tpu.memory_space<vmem>>, vector<28x192xf32>,
    } else {
    }
    %c0 = arith.constant 0 : index
    %c0_1 = arith.constant 0 : index
    %3 = vector.load %arg7[%c0, %c0_1] : memref<28x192xf32, #tpu.memory_space<vmem>>, vector<28x192xf32>
    %c0_2 = arith.constant 0 : index
    %c0_3 = arith.constant 0 : index
    %4 = vector.load %arg3[%c0_2, %c0_3] : memref<28x64xbf16, #tpu.memory_space<vmem>>, vector<28x64xbf16>
    %c0_4 = arith.constant 0 : index
    %c0_5 = arith.constant 0 : index
    %5 = vector.load %arg4[%c0_4, %c0_5] : memref<64x192xbf16, #tpu.memory_space<vmem>>, vector<64x192xbf16>
    %cst = arith.constant dense<0.000000e+00> : vector<28x192xf32>
    %6 = tpu.matmul %4, %5, %cst {dimension_numbers = #tpu.dot_dimension_numbers<[1], [0], [0], [1], [0, 0, 1, 1], [], []>} : vector<28x64xbf16>, vector<64x192xbf16>, vector<28x192xf32> -> vector<28x192xf32>
    %7 = arith.addf %3, %6 : vector<28x192xf32>
    %c0_6 = arith.constant 0 : index
    %c0_7 = arith.constant 0 : index
    %8 = vector.load %arg7[%c0_6, %c0_7] : memref<28x192xf32, #tpu.memory_space<vmem>>, vector<28x192xf32>
    tpu.vector_store %arg7[%c0_6, %c0_7], %7 {strides = array<i32>} : memref<28x192xf32, #tpu.memory_space<vmem>>, vector<28x192xf32>,
    %c0_i32_8 = arith.constant 0 : i32
    %9 = arith.cmpi eq, %arg2, %c0_i32_8 : i32
    %10 = arith.extui %9 : i1 to i32
    %c0_i32_9 = arith.constant 0 : i32
    %11 = arith.cmpi ne, %10, %c0_i32_9 : i32
    scf.if %11 {
      %c0_10 = arith.constant 0 : index
      %c0_11 = arith.constant 0 : index
      %12 = vector.load %arg7[%c0_10, %c0_11] : memref<28x192xf32, #tpu.memory_space<vmem>>, vector<28x192xf32>
      %c0_12 = arith.constant 0 : index
      %c0_13 = arith.constant 0 : index
      %13 = vector.load %arg5[%c0_12, %c0_13] : memref<1x192xf32, #tpu.memory_space<vmem>>, vector<1x192xf32>
      %14 = vector.broadcast %13 : vector<1x192xf32> to vector<28x192xf32>
      %15 = arith.addf %12, %14 : vector<28x192xf32>
      %16 = arith.truncf %15 : vector<28x192xf32> to vector<28x192xbf16>
      %c0_14 = arith.constant 0 : index
      %c0_15 = arith.constant 0 : index
      %17 = vector.load %arg6[%c0_14, %c0_15] : memref<28x192xbf16, #tpu.memory_space<vmem>>, vector<28x192xbf16>
      tpu.vector_store %arg6[%c0_14, %c0_15], %16 {strides = array<i32>} : memref<28x192xbf16, #tpu.memory_space<vmem>>, vector<28x192xbf16>,
    } else {
    }
    return
  }
  func.func @transform_0(%arg0: i32, %arg1: i32, %arg2: i32) -> (i32, i32) {
    %c0_i32 = arith.constant 0 : i32
    return %arg0, %arg2 : i32, i32
  }
  func.func @transform_1(%arg0: i32, %arg1: i32, %arg2: i32) -> (i32, i32) {
    %c0_i32 = arith.constant 0 : i32
    return %arg2, %arg1 : i32, i32
  }
  func.func @transform_2(%arg0: i32, %arg1: i32, %arg2: i32) -> (i32, i32) {
    %c0_i32 = arith.constant 0 : i32
    %c0_i32_0 = arith.constant 0 : i32
    return %c0_i32, %arg1 : i32, i32
  }
  func.func @transform_3(%arg0: i32, %arg1: i32, %arg2: i32) -> (i32, i32) {
    %c0_i32 = arith.constant 0 : i32
    return %arg0, %arg1 : i32, i32
  }
}

module attributes {stable_mosaic.version = 11 : i64} {
  func.func @_attention_kernel(%arg0: i32, %arg1: memref<2xi32, #tpu.memory_space<smem>>, %arg2: memref<1x4x14x16xbf16, #tpu.memory_space<vmem>>, %arg3: memref<1x4x14x16xbf16, #tpu.memory_space<vmem>>, %arg4: memref<1x4x14x16xbf16, #tpu.memory_space<vmem>>, %arg5: memref<1x4x14x16xbf16, #tpu.memory_space<vmem>>) attributes {dimension_semantics = [#tpu.dimension_semantics<parallel>], iteration_bounds = array<i64: 2>, scalar_prefetch = 1 : i64, scratch_operands = 0 : i64, tpu.core_type = #tpu.core_type<tc>, window_params = [{transform_indices = @transform_0, window_bounds = array<i64: 1, 4, 14, 16>}, {transform_indices = @transform_1, window_bounds = array<i64: 1, 4, 14, 16>}, {transform_indices = @transform_2, window_bounds = array<i64: 1, 4, 14, 16>}, {transform_indices = @transform_3, window_bounds = array<i64: 1, 4, 14, 16>}]} {
    %0 = arith.index_cast %arg0 : i32 to index
    %1 = memref.load %arg1[%0] : memref<2xi32, #tpu.memory_space<smem>>
    %c0 = arith.constant 0 : index
    %c0_0 = arith.constant 0 : index
    %c0_1 = arith.constant 0 : index
    %c0_2 = arith.constant 0 : index
    %2 = vector.load %arg2[%c0, %c0_0, %c0_1, %c0_2] : memref<1x4x14x16xbf16, #tpu.memory_space<vmem>>, vector<1x4x14x16xbf16>
    %3 = vector.shape_cast %2 : vector<1x4x14x16xbf16> to vector<4x14x16xbf16>
    %c0_3 = arith.constant 0 : index
    %c0_4 = arith.constant 0 : index
    %c0_5 = arith.constant 0 : index
    %c0_6 = arith.constant 0 : index
    %4 = vector.load %arg3[%c0_3, %c0_4, %c0_5, %c0_6] : memref<1x4x14x16xbf16, #tpu.memory_space<vmem>>, vector<1x4x14x16xbf16>
    %5 = vector.shape_cast %4 : vector<1x4x14x16xbf16> to vector<4x14x16xbf16>
    %c0_7 = arith.constant 0 : index
    %c0_8 = arith.constant 0 : index
    %c0_9 = arith.constant 0 : index
    %c0_10 = arith.constant 0 : index
    %6 = vector.load %arg4[%c0_7, %c0_8, %c0_9, %c0_10] : memref<1x4x14x16xbf16, #tpu.memory_space<vmem>>, vector<1x4x14x16xbf16>
    %7 = vector.shape_cast %6 : vector<1x4x14x16xbf16> to vector<4x14x16xbf16>
    %8 = tpu.iota {dimensions = array<i32: 0>} : vector<14x14xi32>
    %9 = tpu.iota {dimensions = array<i32: 1>} : vector<14x14xi32>
    %10 = arith.cmpi sgt, %9, %8 : vector<14x14xi32>
    %11 = vector.broadcast %1 : i32 to vector<14x14xi32>
    %12 = arith.cmpi sge, %9, %11 : vector<14x14xi32>
    %13 = arith.ori %10, %12 : vector<14x14xi1>
    %cst = arith.constant -1.000000e+09 : f32
    %cst_11 = arith.constant 0.000000e+00 : f32
    %14 = vector.broadcast %cst : f32 to vector<14x14xf32>
    %15 = vector.broadcast %cst_11 : f32 to vector<14x14xf32>
    %16 = arith.select %13, %14, %15 : vector<14x14xi1>, vector<14x14xf32>
    "tpu.trace_start"() <{level = 10 : i32, message = "hqd,hkd->hqk"}> : () -> ()
    %cst_12 = arith.constant dense<0.000000e+00> : vector<4x14x14xf32>
    %17 = tpu.matmul %3, %5, %cst_12 {dimension_numbers = #tpu.dot_dimension_numbers<[2], [2], [1], [1], [0, 0, 0, 1, 1, 1], [0], [0]>} : vector<4x14x16xbf16>, vector<4x14x16xbf16>, vector<4x14x14xf32> -> vector<4x14x14xf32>
    "tpu.trace_stop"() : () -> ()
    %cst_13 = arith.constant 2.500000e-01 : f32
    %18 = vector.broadcast %cst_13 : f32 to vector<4x14x14xf32>
    %19 = arith.mulf %17, %18 : vector<4x14x14xf32>
    %20 = vector.shape_cast %16 : vector<14x14xf32> to vector<1x14x14xf32>
    %21 = vector.broadcast %20 : vector<1x14x14xf32> to vector<4x14x14xf32>
    %22 = arith.addf %19, %21 : vector<4x14x14xf32>
    %cst_14 = arith.constant dense<0xFF800000> : vector<4x14xf32>
    %23 = vector.multi_reduction <maximumf>, %22, %cst_14 [2] : vector<4x14x14xf32> to vector<4x14xf32>
    %24 = vector.shape_cast %23 : vector<4x14xf32> to vector<4x14x1xf32>
    %25 = vector.broadcast %24 : vector<4x14x1xf32> to vector<4x14x14xf32>
    %26 = arith.subf %22, %25 : vector<4x14x14xf32>
    %27 = math.exp %26 : vector<4x14x14xf32>
    %cst_15 = arith.constant dense<0.000000e+00> : vector<4x14xf32>
    %28 = vector.multi_reduction <add>, %27, %cst_15 [2] : vector<4x14x14xf32> to vector<4x14xf32>
    %29 = vector.shape_cast %28 : vector<4x14xf32> to vector<4x14x1xf32>
    %30 = tpu.reciprocal %29 {approx = true} : vector<4x14x1xf32> -> vector<4x14x1xf32>
    %31 = vector.broadcast %30 : vector<4x14x1xf32> to vector<4x14x14xf32>
    %32 = arith.mulf %27, %31 : vector<4x14x14xf32>
    %33 = arith.truncf %32 : vector<4x14x14xf32> to vector<4x14x14xbf16>
    "tpu.trace_start"() <{level = 10 : i32, message = "hqk,hkd->hqd"}> : () -> ()
    %cst_16 = arith.constant dense<0.000000e+00> : vector<4x14x16xf32>
    %34 = tpu.matmul %33, %7, %cst_16 {dimension_numbers = #tpu.dot_dimension_numbers<[2], [1], [1], [2], [0, 0, 0, 1, 1, 2], [0], [0]>} : vector<4x14x14xbf16>, vector<4x14x16xbf16>, vector<4x14x16xf32> -> vector<4x14x16xf32>
    "tpu.trace_stop"() : () -> ()
    %35 = tpu.iota {dimensions = array<i32: 0>} : vector<14x1xi32>
    %36 = vector.broadcast %1 : i32 to vector<14x1xi32>
    %37 = arith.cmpi slt, %35, %36 : vector<14x1xi32>
    %38 = arith.extui %37 : vector<14x1xi1> to vector<14x1xi32>
    %39 = arith.sitofp %38 : vector<14x1xi32> to vector<14x1xf32>
    %40 = vector.shape_cast %39 : vector<14x1xf32> to vector<1x14x1xf32>
    %41 = vector.broadcast %40 : vector<1x14x1xf32> to vector<4x14x16xf32>
    %42 = arith.mulf %34, %41 : vector<4x14x16xf32>
    %43 = arith.truncf %42 : vector<4x14x16xf32> to vector<4x14x16xbf16>
    %c0_17 = arith.constant 0 : index
    %c0_18 = arith.constant 0 : index
    %c0_19 = arith.constant 0 : index
    %c0_20 = arith.constant 0 : index
    %44 = vector.load %arg5[%c0_17, %c0_18, %c0_19, %c0_20] : memref<1x4x14x16xbf16, #tpu.memory_space<vmem>>, vector<1x4x14x16xbf16>
    %45 = vector.shape_cast %44 : vector<1x4x14x16xbf16> to vector<4x14x16xbf16>
    %46 = vector.shape_cast %43 : vector<4x14x16xbf16> to vector<1x4x14x16xbf16>
    tpu.vector_store %arg5[%c0_17, %c0_18, %c0_19, %c0_20], %46 {strides = array<i32>} : memref<1x4x14x16xbf16, #tpu.memory_space<vmem>>, vector<1x4x14x16xbf16>,
    return
  }
  func.func @transform_0(%arg0: i32, %arg1: memref<2xi32, #tpu.memory_space<smem>>) -> (i32, i32, i32, i32) {
    %c0_i32 = arith.constant 0 : i32
    %c0_i32_0 = arith.constant 0 : i32
    %c0_i32_1 = arith.constant 0 : i32
    %c0_i32_2 = arith.constant 0 : i32
    return %arg0, %c0_i32, %c0_i32_0, %c0_i32_1 : i32, i32, i32, i32
  }
  func.func @transform_1(%arg0: i32, %arg1: memref<2xi32, #tpu.memory_space<smem>>) -> (i32, i32, i32, i32) {
    %c0_i32 = arith.constant 0 : i32
    %c0_i32_0 = arith.constant 0 : i32
    %c0_i32_1 = arith.constant 0 : i32
    %c0_i32_2 = arith.constant 0 : i32
    return %arg0, %c0_i32, %c0_i32_0, %c0_i32_1 : i32, i32, i32, i32
  }
  func.func @transform_2(%arg0: i32, %arg1: memref<2xi32, #tpu.memory_space<smem>>) -> (i32, i32, i32, i32) {
    %c0_i32 = arith.constant 0 : i32
    %c0_i32_0 = arith.constant 0 : i32
    %c0_i32_1 = arith.constant 0 : i32
    %c0_i32_2 = arith.constant 0 : i32
    return %arg0, %c0_i32, %c0_i32_0, %c0_i32_1 : i32, i32, i32, i32
  }
  func.func @transform_3(%arg0: i32, %arg1: memref<2xi32, #tpu.memory_space<smem>>) -> (i32, i32, i32, i32) {
    %c0_i32 = arith.constant 0 : i32
    %c0_i32_0 = arith.constant 0 : i32
    %c0_i32_1 = arith.constant 0 : i32
    %c0_i32_2 = arith.constant 0 : i32
    return %arg0, %c0_i32, %c0_i32_0, %c0_i32_1 : i32, i32, i32, i32
  }
}

module attributes {stable_mosaic.version = 11 : i64} {
  func.func @_proj_res_ln_kernel(%arg0: i32, %arg1: memref<28x64xbf16, #tpu.memory_space<vmem>>, %arg2: memref<28x64xbf16, #tpu.memory_space<vmem>>, %arg3: memref<64x64xbf16, #tpu.memory_space<vmem>>, %arg4: memref<1x64xf32, #tpu.memory_space<vmem>>, %arg5: memref<1x64xf32, #tpu.memory_space<vmem>>, %arg6: memref<1x64xf32, #tpu.memory_space<vmem>>, %arg7: memref<28x64xbf16, #tpu.memory_space<vmem>>) attributes {dimension_semantics = [#tpu.dimension_semantics<parallel>], iteration_bounds = array<i64: 1>, scalar_prefetch = 0 : i64, scratch_operands = 0 : i64, tpu.core_type = #tpu.core_type<tc>, window_params = [{transform_indices = @transform_0, window_bounds = array<i64: 28, 64>}, {transform_indices = @transform_1, window_bounds = array<i64: 28, 64>}, {pipeline_mode = #tpu.pipeline_mode<synchronous>, transform_indices = @transform_2, window_bounds = array<i64: 64, 64>}, {pipeline_mode = #tpu.pipeline_mode<synchronous>, transform_indices = @transform_3, window_bounds = array<i64: 1, 64>}, {pipeline_mode = #tpu.pipeline_mode<synchronous>, transform_indices = @transform_4, window_bounds = array<i64: 1, 64>}, {pipeline_mode = #tpu.pipeline_mode<synchronous>, transform_indices = @transform_5, window_bounds = array<i64: 1, 64>}, {transform_indices = @transform_6, window_bounds = array<i64: 28, 64>}]} {
    %c0 = arith.constant 0 : index
    %c0_0 = arith.constant 0 : index
    %0 = vector.load %arg1[%c0, %c0_0] : memref<28x64xbf16, #tpu.memory_space<vmem>>, vector<28x64xbf16>
    %c0_1 = arith.constant 0 : index
    %c0_2 = arith.constant 0 : index
    %1 = vector.load %arg3[%c0_1, %c0_2] : memref<64x64xbf16, #tpu.memory_space<vmem>>, vector<64x64xbf16>
    %cst = arith.constant dense<0.000000e+00> : vector<28x64xf32>
    %2 = tpu.matmul %0, %1, %cst {dimension_numbers = #tpu.dot_dimension_numbers<[1], [0], [0], [1], [0, 0, 1, 1], [], []>} : vector<28x64xbf16>, vector<64x64xbf16>, vector<28x64xf32> -> vector<28x64xf32>
    %c0_3 = arith.constant 0 : index
    %c0_4 = arith.constant 0 : index
    %3 = vector.load %arg4[%c0_3, %c0_4] : memref<1x64xf32, #tpu.memory_space<vmem>>, vector<1x64xf32>
    %4 = vector.broadcast %3 : vector<1x64xf32> to vector<28x64xf32>
    %5 = arith.addf %2, %4 : vector<28x64xf32>
    %c0_5 = arith.constant 0 : index
    %c0_6 = arith.constant 0 : index
    %6 = vector.load %arg2[%c0_5, %c0_6] : memref<28x64xbf16, #tpu.memory_space<vmem>>, vector<28x64xbf16>
    %7 = arith.extf %6 : vector<28x64xbf16> to vector<28x64xf32>
    %8 = arith.addf %5, %7 : vector<28x64xf32>
    %cst_7 = arith.constant dense<0.000000e+00> : vector<28xf32>
    %9 = vector.multi_reduction <add>, %8, %cst_7 [1] : vector<28x64xf32> to vector<28xf32>
    %10 = vector.shape_cast %9 : vector<28xf32> to vector<28x1xf32>
    %cst_8 = arith.constant 6.400000e+01 : f32
    %11 = vector.broadcast %cst_8 : f32 to vector<28x1xf32>
    %12 = arith.divf %10, %11 : vector<28x1xf32>
    %13 = vector.broadcast %12 : vector<28x1xf32> to vector<28x64xf32>
    %14 = arith.subf %8, %13 : vector<28x64xf32>
    %15 = arith.mulf %14, %14 : vector<28x64xf32>
    %cst_9 = arith.constant dense<0.000000e+00> : vector<28xf32>
    %16 = vector.multi_reduction <add>, %15, %cst_9 [1] : vector<28x64xf32> to vector<28xf32>
    %17 = vector.shape_cast %16 : vector<28xf32> to vector<28x1xf32>
    %cst_10 = arith.constant 6.400000e+01 : f32
    %18 = vector.broadcast %cst_10 : f32 to vector<28x1xf32>
    %19 = arith.divf %17, %18 : vector<28x1xf32>
    %20 = vector.broadcast %12 : vector<28x1xf32> to vector<28x64xf32>
    %21 = arith.subf %8, %20 : vector<28x64xf32>
    %cst_11 = arith.constant 9.99999974E-6 : f32
    %22 = vector.broadcast %cst_11 : f32 to vector<28x1xf32>
    %23 = arith.addf %19, %22 : vector<28x1xf32>
    %24 = math.rsqrt %23 : vector<28x1xf32>
    %25 = vector.broadcast %24 : vector<28x1xf32> to vector<28x64xf32>
    %26 = arith.mulf %21, %25 : vector<28x64xf32>
    %c0_12 = arith.constant 0 : index
    %c0_13 = arith.constant 0 : index
    %27 = vector.load %arg5[%c0_12, %c0_13] : memref<1x64xf32, #tpu.memory_space<vmem>>, vector<1x64xf32>
    %28 = vector.broadcast %27 : vector<1x64xf32> to vector<28x64xf32>
    %29 = arith.mulf %26, %28 : vector<28x64xf32>
    %c0_14 = arith.constant 0 : index
    %c0_15 = arith.constant 0 : index
    %30 = vector.load %arg6[%c0_14, %c0_15] : memref<1x64xf32, #tpu.memory_space<vmem>>, vector<1x64xf32>
    %31 = vector.broadcast %30 : vector<1x64xf32> to vector<28x64xf32>
    %32 = arith.addf %29, %31 : vector<28x64xf32>
    %33 = arith.truncf %32 : vector<28x64xf32> to vector<28x64xbf16>
    %c0_16 = arith.constant 0 : index
    %c0_17 = arith.constant 0 : index
    %34 = vector.load %arg7[%c0_16, %c0_17] : memref<28x64xbf16, #tpu.memory_space<vmem>>, vector<28x64xbf16>
    tpu.vector_store %arg7[%c0_16, %c0_17], %33 {strides = array<i32>} : memref<28x64xbf16, #tpu.memory_space<vmem>>, vector<28x64xbf16>,
    return
  }
  func.func @transform_0(%arg0: i32) -> (i32, i32) {
    %c0_i32 = arith.constant 0 : i32
    %c0_i32_0 = arith.constant 0 : i32
    return %arg0, %c0_i32 : i32, i32
  }
  func.func @transform_1(%arg0: i32) -> (i32, i32) {
    %c0_i32 = arith.constant 0 : i32
    %c0_i32_0 = arith.constant 0 : i32
    return %arg0, %c0_i32 : i32, i32
  }
  func.func @transform_2(%arg0: i32) -> (i32, i32) {
    %c0_i32 = arith.constant 0 : i32
    %c0_i32_0 = arith.constant 0 : i32
    %c0_i32_1 = arith.constant 0 : i32
    return %c0_i32, %c0_i32_0 : i32, i32
  }
  func.func @transform_3(%arg0: i32) -> (i32, i32) {
    %c0_i32 = arith.constant 0 : i32
    %c0_i32_0 = arith.constant 0 : i32
    %c0_i32_1 = arith.constant 0 : i32
    return %c0_i32, %c0_i32_0 : i32, i32
  }
  func.func @transform_4(%arg0: i32) -> (i32, i32) {
    %c0_i32 = arith.constant 0 : i32
    %c0_i32_0 = arith.constant 0 : i32
    %c0_i32_1 = arith.constant 0 : i32
    return %c0_i32, %c0_i32_0 : i32, i32
  }
  func.func @transform_5(%arg0: i32) -> (i32, i32) {
    %c0_i32 = arith.constant 0 : i32
    %c0_i32_0 = arith.constant 0 : i32
    %c0_i32_1 = arith.constant 0 : i32
    return %c0_i32, %c0_i32_0 : i32, i32
  }
  func.func @transform_6(%arg0: i32) -> (i32, i32) {
    %c0_i32 = arith.constant 0 : i32
    %c0_i32_0 = arith.constant 0 : i32
    return %arg0, %c0_i32 : i32, i32
  }
}

module attributes {stable_mosaic.version = 11 : i64} {
  func.func @_ffn_res_ln_kernel(%arg0: i32, %arg1: memref<28x64xbf16, #tpu.memory_space<vmem>>, %arg2: memref<64x128xbf16, #tpu.memory_space<vmem>>, %arg3: memref<1x128xf32, #tpu.memory_space<vmem>>, %arg4: memref<128x64xbf16, #tpu.memory_space<vmem>>, %arg5: memref<1x64xf32, #tpu.memory_space<vmem>>, %arg6: memref<1x64xf32, #tpu.memory_space<vmem>>, %arg7: memref<1x64xf32, #tpu.memory_space<vmem>>, %arg8: memref<28x64xbf16, #tpu.memory_space<vmem>>) attributes {dimension_semantics = [#tpu.dimension_semantics<parallel>], iteration_bounds = array<i64: 1>, scalar_prefetch = 0 : i64, scratch_operands = 0 : i64, tpu.core_type = #tpu.core_type<tc>, window_params = [{transform_indices = @transform_0, window_bounds = array<i64: 28, 64>}, {pipeline_mode = #tpu.pipeline_mode<synchronous>, transform_indices = @transform_1, window_bounds = array<i64: 64, 128>}, {pipeline_mode = #tpu.pipeline_mode<synchronous>, transform_indices = @transform_2, window_bounds = array<i64: 1, 128>}, {pipeline_mode = #tpu.pipeline_mode<synchronous>, transform_indices = @transform_3, window_bounds = array<i64: 128, 64>}, {pipeline_mode = #tpu.pipeline_mode<synchronous>, transform_indices = @transform_4, window_bounds = array<i64: 1, 64>}, {pipeline_mode = #tpu.pipeline_mode<synchronous>, transform_indices = @transform_5, window_bounds = array<i64: 1, 64>}, {pipeline_mode = #tpu.pipeline_mode<synchronous>, transform_indices = @transform_6, window_bounds = array<i64: 1, 64>}, {transform_indices = @transform_7, window_bounds = array<i64: 28, 64>}]} {
    %c0 = arith.constant 0 : index
    %c0_0 = arith.constant 0 : index
    %0 = vector.load %arg1[%c0, %c0_0] : memref<28x64xbf16, #tpu.memory_space<vmem>>, vector<28x64xbf16>
    %1 = arith.extf %0 : vector<28x64xbf16> to vector<28x64xf32>
    %c0_1 = arith.constant 0 : index
    %c0_2 = arith.constant 0 : index
    %2 = vector.load %arg2[%c0_1, %c0_2] : memref<64x128xbf16, #tpu.memory_space<vmem>>, vector<64x128xbf16>
    %cst = arith.constant dense<0.000000e+00> : vector<28x128xf32>
    %3 = tpu.matmul %0, %2, %cst {dimension_numbers = #tpu.dot_dimension_numbers<[1], [0], [0], [1], [0, 0, 1, 1], [], []>} : vector<28x64xbf16>, vector<64x128xbf16>, vector<28x128xf32> -> vector<28x128xf32>
    %c0_3 = arith.constant 0 : index
    %c0_4 = arith.constant 0 : index
    %4 = vector.load %arg3[%c0_3, %c0_4] : memref<1x128xf32, #tpu.memory_space<vmem>>, vector<1x128xf32>
    %5 = vector.broadcast %4 : vector<1x128xf32> to vector<28x128xf32>
    %6 = arith.addf %3, %5 : vector<28x128xf32>
    %cst_5 = arith.constant 0.000000e+00 : f32
    %7 = vector.broadcast %cst_5 : f32 to vector<28x128xf32>
    %8 = arith.maximumf %6, %7 : vector<28x128xf32>
    %9 = arith.truncf %8 : vector<28x128xf32> to vector<28x128xbf16>
    %c0_6 = arith.constant 0 : index
    %c0_7 = arith.constant 0 : index
    %10 = vector.load %arg4[%c0_6, %c0_7] : memref<128x64xbf16, #tpu.memory_space<vmem>>, vector<128x64xbf16>
    %cst_8 = arith.constant dense<0.000000e+00> : vector<28x64xf32>
    %11 = tpu.matmul %9, %10, %cst_8 {dimension_numbers = #tpu.dot_dimension_numbers<[1], [0], [0], [1], [0, 0, 1, 1], [], []>} : vector<28x128xbf16>, vector<128x64xbf16>, vector<28x64xf32> -> vector<28x64xf32>
    %c0_9 = arith.constant 0 : index
    %c0_10 = arith.constant 0 : index
    %12 = vector.load %arg5[%c0_9, %c0_10] : memref<1x64xf32, #tpu.memory_space<vmem>>, vector<1x64xf32>
    %13 = vector.broadcast %12 : vector<1x64xf32> to vector<28x64xf32>
    %14 = arith.addf %11, %13 : vector<28x64xf32>
    %15 = arith.addf %14, %1 : vector<28x64xf32>
    %cst_11 = arith.constant dense<0.000000e+00> : vector<28xf32>
    %16 = vector.multi_reduction <add>, %15, %cst_11 [1] : vector<28x64xf32> to vector<28xf32>
    %17 = vector.shape_cast %16 : vector<28xf32> to vector<28x1xf32>
    %cst_12 = arith.constant 6.400000e+01 : f32
    %18 = vector.broadcast %cst_12 : f32 to vector<28x1xf32>
    %19 = arith.divf %17, %18 : vector<28x1xf32>
    %20 = vector.broadcast %19 : vector<28x1xf32> to vector<28x64xf32>
    %21 = arith.subf %15, %20 : vector<28x64xf32>
    %22 = arith.mulf %21, %21 : vector<28x64xf32>
    %cst_13 = arith.constant dense<0.000000e+00> : vector<28xf32>
    %23 = vector.multi_reduction <add>, %22, %cst_13 [1] : vector<28x64xf32> to vector<28xf32>
    %24 = vector.shape_cast %23 : vector<28xf32> to vector<28x1xf32>
    %cst_14 = arith.constant 6.400000e+01 : f32
    %25 = vector.broadcast %cst_14 : f32 to vector<28x1xf32>
    %26 = arith.divf %24, %25 : vector<28x1xf32>
    %27 = vector.broadcast %19 : vector<28x1xf32> to vector<28x64xf32>
    %28 = arith.subf %15, %27 : vector<28x64xf32>
    %cst_15 = arith.constant 9.99999974E-6 : f32
    %29 = vector.broadcast %cst_15 : f32 to vector<28x1xf32>
    %30 = arith.addf %26, %29 : vector<28x1xf32>
    %31 = math.rsqrt %30 : vector<28x1xf32>
    %32 = vector.broadcast %31 : vector<28x1xf32> to vector<28x64xf32>
    %33 = arith.mulf %28, %32 : vector<28x64xf32>
    %c0_16 = arith.constant 0 : index
    %c0_17 = arith.constant 0 : index
    %34 = vector.load %arg6[%c0_16, %c0_17] : memref<1x64xf32, #tpu.memory_space<vmem>>, vector<1x64xf32>
    %35 = vector.broadcast %34 : vector<1x64xf32> to vector<28x64xf32>
    %36 = arith.mulf %33, %35 : vector<28x64xf32>
    %c0_18 = arith.constant 0 : index
    %c0_19 = arith.constant 0 : index
    %37 = vector.load %arg7[%c0_18, %c0_19] : memref<1x64xf32, #tpu.memory_space<vmem>>, vector<1x64xf32>
    %38 = vector.broadcast %37 : vector<1x64xf32> to vector<28x64xf32>
    %39 = arith.addf %36, %38 : vector<28x64xf32>
    %40 = arith.truncf %39 : vector<28x64xf32> to vector<28x64xbf16>
    %c0_20 = arith.constant 0 : index
    %c0_21 = arith.constant 0 : index
    %41 = vector.load %arg8[%c0_20, %c0_21] : memref<28x64xbf16, #tpu.memory_space<vmem>>, vector<28x64xbf16>
    tpu.vector_store %arg8[%c0_20, %c0_21], %40 {strides = array<i32>} : memref<28x64xbf16, #tpu.memory_space<vmem>>, vector<28x64xbf16>,
    return
  }
  func.func @transform_0(%arg0: i32) -> (i32, i32) {
    %c0_i32 = arith.constant 0 : i32
    %c0_i32_0 = arith.constant 0 : i32
    return %arg0, %c0_i32 : i32, i32
  }
  func.func @transform_1(%arg0: i32) -> (i32, i32) {
    %c0_i32 = arith.constant 0 : i32
    %c0_i32_0 = arith.constant 0 : i32
    %c0_i32_1 = arith.constant 0 : i32
    return %c0_i32, %c0_i32_0 : i32, i32
  }
  func.func @transform_2(%arg0: i32) -> (i32, i32) {
    %c0_i32 = arith.constant 0 : i32
    %c0_i32_0 = arith.constant 0 : i32
    %c0_i32_1 = arith.constant 0 : i32
    return %c0_i32, %c0_i32_0 : i32, i32
  }
  func.func @transform_3(%arg0: i32) -> (i32, i32) {
    %c0_i32 = arith.constant 0 : i32
    %c0_i32_0 = arith.constant 0 : i32
    %c0_i32_1 = arith.constant 0 : i32
    return %c0_i32, %c0_i32_0 : i32, i32
  }
  func.func @transform_4(%arg0: i32) -> (i32, i32) {
    %c0_i32 = arith.constant 0 : i32
    %c0_i32_0 = arith.constant 0 : i32
    %c0_i32_1 = arith.constant 0 : i32
    return %c0_i32, %c0_i32_0 : i32, i32
  }
  func.func @transform_5(%arg0: i32) -> (i32, i32) {
    %c0_i32 = arith.constant 0 : i32
    %c0_i32_0 = arith.constant 0 : i32
    %c0_i32_1 = arith.constant 0 : i32
    return %c0_i32, %c0_i32_0 : i32, i32
  }
  func.func @transform_6(%arg0: i32) -> (i32, i32) {
    %c0_i32 = arith.constant 0 : i32
    %c0_i32_0 = arith.constant 0 : i32
    %c0_i32_1 = arith.constant 0 : i32
    return %c0_i32, %c0_i32_0 : i32, i32
  }
  func.func @transform_7(%arg0: i32) -> (i32, i32) {
    %c0_i32 = arith.constant 0 : i32
    %c0_i32_0 = arith.constant 0 : i32
    return %arg0, %c0_i32 : i32, i32
  }
}

module attributes {stable_mosaic.version = 11 : i64} {
  func.func @_linear_kernel(%arg0: i32, %arg1: i32, %arg2: i32, %arg3: memref<16x64xbf16, #tpu.memory_space<vmem>>, %arg4: memref<64x128xbf16, #tpu.memory_space<vmem>>, %arg5: memref<1x128xf32, #tpu.memory_space<vmem>>, %arg6: memref<16x1xf32, #tpu.memory_space<vmem>>, %arg7: memref<16x128xf32, #tpu.memory_space<vmem>>, %arg8: memref<16x128xf32, #tpu.memory_space<vmem>>) attributes {dimension_semantics = [#tpu.dimension_semantics<parallel>, #tpu.dimension_semantics<parallel>, #tpu.dimension_semantics<arbitrary>], iteration_bounds = array<i64: 1, 1, 1>, scalar_prefetch = 0 : i64, scratch_operands = 1 : i64, tpu.core_type = #tpu.core_type<tc>, window_params = [{transform_indices = @transform_0, window_bounds = array<i64: 16, 64>}, {transform_indices = @transform_1, window_bounds = array<i64: 64, 128>}, {transform_indices = @transform_2, window_bounds = array<i64: 1, 128>}, {transform_indices = @transform_3, window_bounds = array<i64: 16, 1>}, {transform_indices = @transform_4, window_bounds = array<i64: 16, 128>}]} {
    %c0_i32 = arith.constant 0 : i32
    %0 = arith.cmpi eq, %arg2, %c0_i32 : i32
    %1 = arith.extui %0 : i1 to i32
    %c0_i32_0 = arith.constant 0 : i32
    %2 = arith.cmpi ne, %1, %c0_i32_0 : i32
    scf.if %2 {
      %cst_10 = arith.constant 0.000000e+00 : f32
      %12 = vector.broadcast %cst_10 : f32 to vector<16x128xf32>
      %c0_11 = arith.constant 0 : index
      %c0_12 = arith.constant 0 : index
      %13 = vector.load %arg8[%c0_11, %c0_12] : memref<16x128xf32, #tpu.memory_space<vmem>>, vector<16x128xf32>
      tpu.vector_store %arg8[%c0_11, %c0_12], %12 {strides = array<i32>} : memref<16x128xf32, #tpu.memory_space<vmem>>, vector<16x128xf32>,
    } else {
    }
    %c0 = arith.constant 0 : index
    %c0_1 = arith.constant 0 : index
    %3 = vector.load %arg8[%c0, %c0_1] : memref<16x128xf32, #tpu.memory_space<vmem>>, vector<16x128xf32>
    %c0_2 = arith.constant 0 : index
    %c0_3 = arith.constant 0 : index
    %4 = vector.load %arg3[%c0_2, %c0_3] : memref<16x64xbf16, #tpu.memory_space<vmem>>, vector<16x64xbf16>
    %c0_4 = arith.constant 0 : index
    %c0_5 = arith.constant 0 : index
    %5 = vector.load %arg4[%c0_4, %c0_5] : memref<64x128xbf16, #tpu.memory_space<vmem>>, vector<64x128xbf16>
    %cst = arith.constant dense<0.000000e+00> : vector<16x128xf32>
    %6 = tpu.matmul %4, %5, %cst {dimension_numbers = #tpu.dot_dimension_numbers<[1], [0], [0], [1], [0, 0, 1, 1], [], []>} : vector<16x64xbf16>, vector<64x128xbf16>, vector<16x128xf32> -> vector<16x128xf32>
    %7 = arith.addf %3, %6 : vector<16x128xf32>
    %c0_6 = arith.constant 0 : index
    %c0_7 = arith.constant 0 : index
    %8 = vector.load %arg8[%c0_6, %c0_7] : memref<16x128xf32, #tpu.memory_space<vmem>>, vector<16x128xf32>
    tpu.vector_store %arg8[%c0_6, %c0_7], %7 {strides = array<i32>} : memref<16x128xf32, #tpu.memory_space<vmem>>, vector<16x128xf32>,
    %c0_i32_8 = arith.constant 0 : i32
    %9 = arith.cmpi eq, %arg2, %c0_i32_8 : i32
    %10 = arith.extui %9 : i1 to i32
    %c0_i32_9 = arith.constant 0 : i32
    %11 = arith.cmpi ne, %10, %c0_i32_9 : i32
    scf.if %11 {
      %c0_10 = arith.constant 0 : index
      %c0_11 = arith.constant 0 : index
      %12 = vector.load %arg8[%c0_10, %c0_11] : memref<16x128xf32, #tpu.memory_space<vmem>>, vector<16x128xf32>
      %c0_12 = arith.constant 0 : index
      %c0_13 = arith.constant 0 : index
      %13 = vector.load %arg5[%c0_12, %c0_13] : memref<1x128xf32, #tpu.memory_space<vmem>>, vector<1x128xf32>
      %14 = vector.broadcast %13 : vector<1x128xf32> to vector<16x128xf32>
      %15 = arith.addf %12, %14 : vector<16x128xf32>
      %c0_14 = arith.constant 0 : index
      %c0_15 = arith.constant 0 : index
      %16 = vector.load %arg6[%c0_14, %c0_15] : memref<16x1xf32, #tpu.memory_space<vmem>>, vector<16x1xf32>
      %17 = vector.broadcast %16 : vector<16x1xf32> to vector<16x128xf32>
      %18 = arith.mulf %15, %17 : vector<16x128xf32>
      %c0_16 = arith.constant 0 : index
      %c0_17 = arith.constant 0 : index
      %19 = vector.load %arg7[%c0_16, %c0_17] : memref<16x128xf32, #tpu.memory_space<vmem>>, vector<16x128xf32>
      tpu.vector_store %arg7[%c0_16, %c0_17], %18 {strides = array<i32>} : memref<16x128xf32, #tpu.memory_space<vmem>>, vector<16x128xf32>,
    } else {
    }
    return
  }
  func.func @transform_0(%arg0: i32, %arg1: i32, %arg2: i32) -> (i32, i32) {
    %c0_i32 = arith.constant 0 : i32
    return %arg0, %arg2 : i32, i32
  }
  func.func @transform_1(%arg0: i32, %arg1: i32, %arg2: i32) -> (i32, i32) {
    %c0_i32 = arith.constant 0 : i32
    return %arg2, %arg1 : i32, i32
  }
  func.func @transform_2(%arg0: i32, %arg1: i32, %arg2: i32) -> (i32, i32) {
    %c0_i32 = arith.constant 0 : i32
    %c0_i32_0 = arith.constant 0 : i32
    return %c0_i32, %arg1 : i32, i32
  }
  func.func @transform_3(%arg0: i32, %arg1: i32, %arg2: i32) -> (i32, i32) {
    %c0_i32 = arith.constant 0 : i32
    %c0_i32_0 = arith.constant 0 : i32
    return %arg0, %c0_i32 : i32, i32
  }
  func.func @transform_4(%arg0: i32, %arg1: i32, %arg2: i32) -> (i32, i32) {
    %c0_i32 = arith.constant 0 : i32
    return %arg0, %arg1 : i32, i32
  }
}

</mosaic_0001>

<llo_original>
// kernel: valle_forward.9
$region0: #{valle_forward.9}
  #allocation0 [shape = 'u32[]', space=smem, size = 0x4, offset = 0x4, fixed_abs, tag = 'smem constant byte address 0x4 - core index']
  #allocation1 [shape = 'u32[72,128]{1,0:T(1,128)}', space=vmem, size = 0x9000, scoped, tag = 'internal scratch']
  #allocation2 [shape = 'f32[28,192]{1,0:T(8,128)}', space=vmem, size = 0x8000, scoped, tag = 'scratch operand']
  %s0 = inlined_call_operand.vmem [shape: bf16[28,64], index: 0, kind: input, shape index: {}]
  %s1 = inlined_call_operand.vmem [shape: bf16[64,192], index: 1, kind: input, shape index: {}]
  %s2 = inlined_call_operand.vmem [shape: f32[1,192], index: 2, kind: input, shape index: {}]
  %s3 = inlined_call_operand.vmem [shape: bf16[28,192], index: 3, kind: output, shape index: {}]
  %s4 = sld [smem:[#allocation0]]
  $region30: #{valle_forward.9} parent=0
    _
  %s6 = ssub.s32 1, %s4
  %s7 = scalar_select 0, %s6, %s4
  // Predicated region
  $region2: #{valle_forward.9} parent=0 // pred_check
    _
  $region3: #{valle_forward.9} parent=0 // pred_check_branch
    %9 = sbr.rel (0) target = $region5
  $region4: #{valle_forward.9} parent=0 // pred_region
    _
  $region5: #{valle_forward.9} parent=0 // pred_fallthru
    _
  // Predicated region
  $region6: #{valle_forward.9} parent=0 // pred_check
    _
  $region7: #{valle_forward.9} parent=0 // pred_check_branch
    %11 = sbr.rel (0) target = $region9
  $region8: #{valle_forward.9} parent=0 // pred_region
    _
  $region9: #{valle_forward.9} parent=0 // pred_fallthru
    _
  // Predicated region
  $region10: #{valle_forward.9} parent=0 // pred_check
    _
  $region11: #{valle_forward.9} parent=0 // pred_check_branch
    %13 = sbr.rel (0) target = $region13
  $region12: #{valle_forward.9} parent=0 // pred_region
    _
  $region13: #{valle_forward.9} parent=0 // pred_fallthru
    _
  %p15 = scmp.eq.s32.totalorder 0, 0
  // Predicated region
  $region14: #{valle_forward.9} parent=0 // pred_check
    %p16 = pneg %p15
  $region15: #{valle_forward.9} parent=0 // pred_check_branch
    %18 = sbr.rel (%p16) target = $region17
  $region16: #{valle_forward.9} parent=0 // pred_region
    %19 = vst [vmem:[#allocation2] sm:$0xff] 0.0
    %vm20 = vcmask 523264
    %21 = vst.msk [vmem:[#allocation2 + $0x8] sm:$0xff] %vm20, 0.0
    %22 = vst [vmem:[#allocation2 + $0x10] sm:$0xff] 0.0
    %23 = vst.msk [vmem:[#allocation2 + $0x18] sm:$0xff] %vm20, 0.0
    %24 = vst [vmem:[#allocation2 + $0x20] sm:$0xff] 0.0
    %25 = vst.msk [vmem:[#allocation2 + $0x28] sm:$0xff] %vm20, 0.0
    %26 = vst [vmem:[#allocation2 + $0x30] sm:$0xf] 0.0
    %vm27 = vcmask 519168
    %28 = vst.msk [vmem:[#allocation2 + $0x38] sm:$0xf] %vm27, 0.0
  $region17: #{valle_forward.9} parent=0 // pred_fallthru
    _
  %v29 = vld [vmem:[#allocation2] sm:$0xff]
  %v30 = vld [vmem:[#allocation2 + $0x8] sm:$0xff]
  %v31 = vld [vmem:[#allocation2 + $0x10] sm:$0xff]
  %v32 = vld [vmem:[#allocation2 + $0x18] sm:$0xff]
  %v33 = vld [vmem:[#allocation2 + $0x20] sm:$0xff]
  %v34 = vld [vmem:[#allocation2 + $0x28] sm:$0xff]
  %v35 = vld [vmem:[#allocation2 + $0x30] sm:$0xf]
  %v36 = vld [vmem:[#allocation2 + $0x38] sm:$0xf]
  %v37 = vld [vmem:[%s0] sm:$0xf]
  %v38 = vld [vmem:[%s0 + $0x4] sm:$0xf]
  %v39 = vld [vmem:[%s0 + $0x8] sm:$0xf]
  %v40 = vld [vmem:[%s0 + $0xc] sm:$0x3]
  %v41 = vld [vmem:[%s1] sm:$0xff]
  %v42 = vld [vmem:[%s1 + $0x8] sm:$0xff]
  %v43 = vld [vmem:[%s1 + $0x10] sm:$0xff]
  %v44 = vld [vmem:[%s1 + $0x18] sm:$0xff]
  %v45 = vld [vmem:[%s1 + $0x20] sm:$0xff]
  %v46 = vld [vmem:[%s1 + $0x28] sm:$0xff]
  %v47 = vld [vmem:[%s1 + $0x30] sm:$0xff]
  %v48 = vld [vmem:[%s1 + $0x38] sm:$0xff]
  %v53 = vunpack.c.l.b16 %v37
  %v54 = vunpack.c.l.b16 %v38
  %v55 = vunpack.c.l.b16 %v39
  %v56 = vunpack.c.l.b16 %v40
  %v57 = vpack.c.b16 %v54, %v53
  %v58 = vpack.c.b16 %v56, %v55
  %v67 = vunpack.c.l.b16 %v41
  %v68 = vunpack.c.h.b16 %v41
  %v69 = vunpack.c.l.b16 %v42
  %v70 = vunpack.c.h.b16 %v42
  %v71 = vunpack.c.l.b16 %v43
  %v72 = vunpack.c.h.b16 %v43
  %v73 = vunpack.c.l.b16 %v44
  %v74 = vunpack.c.h.b16 %v44
  %v75 = vunpack.c.l.b16 %v45
  %v76 = vunpack.c.h.b16 %v45
  %v77 = vunpack.c.l.b16 %v46
  %v78 = vunpack.c.h.b16 %v46
  %v79 = vunpack.c.l.b16 %v47
  %v80 = vunpack.c.h.b16 %v47
  %v81 = vunpack.c.l.b16 %v48
  %v82 = vunpack.c.h.b16 %v48
  %v83 = vpack.c.b16 %v69, %v67
  %v84 = vpack.c.b16 %v70, %v68
  %v85 = vpack.c.b16 %v73, %v71
  %v86 = vpack.c.b16 %v74, %v72
  %v87 = vpack.c.b16 %v77, %v75
  %v88 = vpack.c.b16 %v78, %v76
  %v89 = vpack.c.b16 %v81, %v79
  %v90 = vpack.c.b16 %v82, %v80
  %vm99 = vcmask 523264
  %v101 = vsel %vm99, %v57, 0
  %v104 = vsel %vm99, %v58, 0
  %106 = vmatpush.bf16.msra.mxu0 0
  %107 = vmatpush.bf16.msra.mxu0 0
  %108 = vmatpush.bf16.msra.mxu0 0
  %109 = vmatpush.bf16.msra.mxu0 0
  %110 = vmatpush.bf16.msra.mxu0 %v89
  %111 = vmatpush.bf16.msra.mxu0 %v87
  %112 = vmatpush.bf16.msra.mxu0 %v85
  %113 = vmatpush.bf16.msra.mxu0 %v83
  %114 = vmatmul.bf16.gmra.mxu0 %v101
  %v115 = vpop.f32.mrf.mxu0
  %v116 = vadd.f32 0.0, %v115
  %v117 = vpop.f32.mrf.mxu0
  %v118 = vadd.f32 0.0, %v117
  %119 = vmatmul.bf16.gmra.mxu0 %v104
  %v120 = vpop.f32.mrf.mxu0
  %v121 = vadd.f32 0.0, %v120
  %v122 = vpop.f32.mrf.mxu0
  %v123 = vadd.f32 0.0, %v122
  %124 = vdwg.mxu0
  %125 = vmatpush.bf16.msra.mxu0 0
  %126 = vmatpush.bf16.msra.mxu0 0
  %127 = vmatpush.bf16.msra.mxu0 0
  %128 = vmatpush.bf16.msra.mxu0 0
  %129 = vmatpush.bf16.msra.mxu0 %v90
  %130 = vmatpush.bf16.msra.mxu0 %v88
  %131 = vmatpush.bf16.msra.mxu0 %v86
  %132 = vmatpush.bf16.msra.mxu0 %v84
  %133 = vmatmul.bf16.gmra.mxu0 %v101
  %v134 = vpop.f32.mrf.mxu0
  %v135 = vadd.f32 0.0, %v134
  %v136 = vpop.f32.mrf.mxu0
  %v137 = vadd.f32 0.0, %v136
  %138 = vmatmul.bf16.gmra.mxu0 %v104
  %v139 = vpop.f32.mrf.mxu0
  %v140 = vadd.f32 0.0, %v139
  %v141 = vpop.f32.mrf.mxu0
  %v142 = vadd.f32 0.0, %v141
  %143 = vdwg.mxu0
  %v144 = vadd.f32 %v29, %v116
  %v145 = vadd.f32 %v30, %v135
  %v146 = vadd.f32 %v31, %v118
  %v147 = vadd.f32 %v32, %v137
  %v148 = vadd.f32 %v33, %v121
  %v149 = vadd.f32 %v34, %v140
  %v150 = vadd.f32 %v35, %v123
  %v151 = vadd.f32 %v36, %v142
  %152 = vst [vmem:[#allocation2] sm:$0xff] %v144
  %153 = vst.msk [vmem:[#allocation2 + $0x8] sm:$0xff] %vm99, %v145
  %154 = vst [vmem:[#allocation2 + $0x10] sm:$0xff] %v146
  %155 = vst.msk [vmem:[#allocation2 + $0x18] sm:$0xff] %vm99, %v147
  %156 = vst [vmem:[#allocation2 + $0x20] sm:$0xff] %v148
  %157 = vst.msk [vmem:[#allocation2 + $0x28] sm:$0xff] %vm99, %v149
  %158 = vst [vmem:[#allocation2 + $0x30] sm:$0xf] %v150
  %vm159 = vcmask 519168
  %160 = vst.msk [vmem:[#allocation2 + $0x38] sm:$0xf] %vm159, %v151
  // Predicated region
  $region18: #{valle_forward.9} parent=0 // pred_check
    %p161 = pneg %p15
  $region19: #{valle_forward.9} parent=0 // pred_check_branch
    %163 = sbr.rel (%p161) target = $region21
  $region20: #{valle_forward.9} parent=0 // pred_region
    %v164 = vld [vmem:[#allocation2] sm:$0xff]
    %v165 = vld [vmem:[#allocation2 + $0x8] sm:$0xff]
    %v166 = vld [vmem:[#allocation2 + $0x10] sm:$0xff]
    %v167 = vld [vmem:[#allocation2 + $0x18] sm:$0xff]
    %v168 = vld [vmem:[#allocation2 + $0x20] sm:$0xff]
    %v169 = vld [vmem:[#allocation2 + $0x28] sm:$0xff]
    %v170 = vld [vmem:[#allocation2 + $0x30] sm:$0xf]
    %v171 = vld [vmem:[#allocation2 + $0x38] sm:$0xf]
    %v172 = vld [vmem:[%s2] sm:$0x3]
    %v174 = vperm.slane %v172, 0
    %v175 = vperm.slane %v172, 1
    %v178 = vadd.f32 %v164, %v174
    %v179 = vadd.f32 %v165, %v175
    %v180 = vadd.f32 %v166, %v174
    %v181 = vadd.f32 %v167, %v175
    %v182 = vadd.f32 %v168, %v174
    %v183 = vadd.f32 %v169, %v175
    %v184 = vadd.f32 %v170, %v174
    %v185 = vadd.f32 %v171, %v175
    %v186 = vpack.c.bf16 %v179, %v178
    %v187 = vpack.c.bf16 %v181, %v180
    %v188 = vpack.c.bf16 %v183, %v182
    %v189 = vpack.c.bf16 %v185, %v184
    %vm190 = vcmask 1043456
    %vm191 = vcmask 523268
    %vm192 = vmor %vm191, %vm190
    %193 = vst.msk [vmem:[%s3] sm:$0xff] %vm192, %v186
    %194 = vst.msk [vmem:[%s3 + $0x8] sm:$0xff] %vm192, %v187
    %195 = vst.msk [vmem:[%s3 + $0x10] sm:$0xff] %vm192, %v188
    %vm196 = vcmask 1041408
    %vm197 = vcmask 521220
    %vm198 = vmor %vm197, %vm196
    %199 = vst.msk [vmem:[%s3 + $0x18] sm:$0x33] %vm198, %v189
  $region21: #{valle_forward.9} parent=0 // pred_fallthru
    _
  // Predicated region
  $region22: #{valle_forward.9} parent=0 // pred_check
    _
  $region23: #{valle_forward.9} parent=0 // pred_check_branch
    %201 = sbr.rel (0) target = $region25
  $region24: #{valle_forward.9} parent=0 // pred_region
    _
  $region25: #{valle_forward.9} parent=0 // pred_fallthru
    _
  // Predicated region
  $region26: #{valle_forward.9} parent=0 // pred_check
    _
  $region27: #{valle_forward.9} parent=0 // pred_check_branch
    %203 = sbr.rel (0) target = $region29
  $region28: #{valle_forward.9} parent=0 // pred_region
    _
  $region29: #{valle_forward.9} parent=0 // pred_fallthru
    _

// kernel: valle_forward.11
$region0: #{valle_forward.11}
  #allocation0 [shape = 'u32[]', space=smem, size = 0x4, offset = 0x4, fixed_abs, tag = 'smem constant byte address 0x4 - core index']
  #allocation1 [shape = 'u32[72,128]{1,0:T(1,128)}', space=vmem, size = 0x9000, scoped, tag = 'internal scratch']
  %s0 = inlined_call_operand.vmem [shape: bf16[28,64], index: 0, kind: input, shape index: {}]
  %s1 = inlined_call_operand.vmem [shape: bf16[28,64], index: 1, kind: input, shape index: {}]
  %s2 = inlined_call_operand.vmem [shape: bf16[64,64], index: 2, kind: input, shape index: {}]
  %s3 = inlined_call_operand.vmem [shape: f32[1,64], index: 3, kind: input, shape index: {}]
  %s4 = inlined_call_operand.vmem [shape: f32[1,64], index: 4, kind: input, shape index: {}]
  %s5 = inlined_call_operand.vmem [shape: f32[1,64], index: 5, kind: input, shape index: {}]
  %s6 = inlined_call_operand.vmem [shape: bf16[28,64], index: 6, kind: output, shape index: {}]
  %s7 = sld [smem:[#allocation0]]
  $region34: #{valle_forward.11} parent=0
    _
  %s9 = ssub.s32 1, %s7
  %s10 = scalar_select 0, %s9, %s7
  // Predicated region
  $region2: #{valle_forward.11} parent=0 // pred_check
    _
  $region3: #{valle_forward.11} parent=0 // pred_check_branch
    %12 = sbr.rel (0) target = $region5
  $region4: #{valle_forward.11} parent=0 // pred_region
    _
  $region5: #{valle_forward.11} parent=0 // pred_fallthru
    _
  // Predicated region
  $region6: #{valle_forward.11} parent=0 // pred_check
    _
  $region7: #{valle_forward.11} parent=0 // pred_check_branch
    %14 = sbr.rel (0) target = $region9
  $region8: #{valle_forward.11} parent=0 // pred_region
    _
  $region9: #{valle_forward.11} parent=0 // pred_fallthru
    _
  // Predicated region
  $region10: #{valle_forward.11} parent=0 // pred_check
    _
  $region11: #{valle_forward.11} parent=0 // pred_check_branch
    %16 = sbr.rel (0) target = $region13
  $region12: #{valle_forward.11} parent=0 // pred_region
    _
  $region13: #{valle_forward.11} parent=0 // pred_fallthru
    _
  // Predicated region
  $region14: #{valle_forward.11} parent=0 // pred_check
    _
  $region15: #{valle_forward.11} parent=0 // pred_check_branch
    %18 = sbr.rel (0) target = $region17
  $region16: #{valle_forward.11} parent=0 // pred_region
    _
  $region17: #{valle_forward.11} parent=0 // pred_fallthru
    _
  // Predicated region
  $region18: #{valle_forward.11} parent=0 // pred_check
    _
  $region19: #{valle_forward.11} parent=0 // pred_check_branch
    %20 = sbr.rel (0) target = $region21
  $region20: #{valle_forward.11} parent=0 // pred_region
    _
  $region21: #{valle_forward.11} parent=0 // pred_fallthru
    _
  // Predicated region
  $region22: #{valle_forward.11} parent=0 // pred_check
    _
  $region23: #{valle_forward.11} parent=0 // pred_check_branch
    %22 = sbr.rel (0) target = $region25
  $region24: #{valle_forward.11} parent=0 // pred_region
    _
  $region25: #{valle_forward.11} parent=0 // pred_fallthru
    _
  %v24 = vld [vmem:[%s0] sm:$0xf]
  %v25 = vld [vmem:[%s0 + $0x4] sm:$0xf]
  %v26 = vld [vmem:[%s0 + $0x8] sm:$0xf]
  %v27 = vld [vmem:[%s0 + $0xc] sm:$0x3]
  %v28 = vld [vmem:[%s2] sm:$0xf]
  %v29 = vld [vmem:[%s2 + $0x4] sm:$0xf]
  %v30 = vld [vmem:[%s2 + $0x8] sm:$0xf]
  %v31 = vld [vmem:[%s2 + $0xc] sm:$0xf]
  %v32 = vld [vmem:[%s2 + $0x10] sm:$0xf]
  %v33 = vld [vmem:[%s2 + $0x14] sm:$0xf]
  %v34 = vld [vmem:[%s2 + $0x18] sm:$0xf]
  %v35 = vld [vmem:[%s2 + $0x1c] sm:$0xf]
  %v36 = vld [vmem:[%s3] sm:$0x1]
  %v38 = vperm.slane %v36, 0
  %v44 = vunpack.c.l.b16 %v24
  %v45 = vunpack.c.l.b16 %v25
  %v46 = vunpack.c.l.b16 %v26
  %v47 = vunpack.c.l.b16 %v27
  %v48 = vpack.c.b16 %v45, %v44
  %v49 = vpack.c.b16 %v47, %v46
  %v58 = vunpack.c.l.b16 %v28
  %v59 = vunpack.c.l.b16 %v29
  %v60 = vunpack.c.l.b16 %v30
  %v61 = vunpack.c.l.b16 %v31
  %v62 = vunpack.c.l.b16 %v32
  %v63 = vunpack.c.l.b16 %v33
  %v64 = vunpack.c.l.b16 %v34
  %v65 = vunpack.c.l.b16 %v35
  %v66 = vpack.c.b16 %v59, %v58
  %v67 = vpack.c.b16 %v61, %v60
  %v68 = vpack.c.b16 %v63, %v62
  %v69 = vpack.c.b16 %v65, %v64
  %vm74 = vcmask 523264
  %v76 = vsel %vm74, %v48, 0
  %v79 = vsel %vm74, %v49, 0
  %81 = vmatpush.bf16.msra.mxu0 0
  %82 = vmatpush.bf16.msra.mxu0 0
  %83 = vmatpush.bf16.msra.mxu0 0
  %84 = vmatpush.bf16.msra.mxu0 0
  %85 = vmatpush.bf16.msra.mxu0 %v69
  %86 = vmatpush.bf16.msra.mxu0 %v68
  %87 = vmatpush.bf16.msra.mxu0 %v67
  %88 = vmatpush.bf16.msra.mxu0 %v66
  %89 = vmatmul.bf16.gmra.mxu0 %v76
  %v90 = vpop.f32.mrf.mxu0
  %v91 = vadd.f32 %v38, %v90
  %v92 = vpop.f32.mrf.mxu0
  %v93 = vadd.f32 %v38, %v92
  %94 = vmatmul.bf16.gmra.mxu0 %v79
  %v95 = vpop.f32.mrf.mxu0
  %v96 = vadd.f32 %v38, %v95
  %v97 = vpop.f32.mrf.mxu0
  %v98 = vadd.f32 %v38, %v97
  %99 = vdwg.mxu0
  %v100 = vld [vmem:[%s1] sm:$0xf]
  %v101 = vld [vmem:[%s1 + $0x4] sm:$0xf]
  %v102 = vld [vmem:[%s1 + $0x8] sm:$0xf]
  %v103 = vld [vmem:[%s1 + $0xc] sm:$0x3]
  %v104 = vunpack.c.l.bf16 %v100
  %v105 = vunpack.c.l.bf16 %v101
  %v106 = vunpack.c.l.bf16 %v102
  %v107 = vunpack.c.l.bf16 %v103
  %v108 = vadd.f32 %v91, %v104
  %v109 = vadd.f32 %v93, %v105
  %v110 = vadd.f32 %v96, %v106
  %v111 = vadd.f32 %v98, %v107
  %v112 = vsel %vm74, %v108, 0.0
  %113 = vadd.xlane.f32.xlu0 %v112
  %v114 = vpop.xlane.xlu0 %113
  %v115 = vsel %vm74, %v109, 0.0
  %116 = vadd.xlane.f32.xlu0 %v115
  %v117 = vpop.xlane.xlu0 %116
  %v118 = vsel %vm74, %v110, 0.0
  %119 = vadd.xlane.f32.xlu0 %v118
  %v120 = vpop.xlane.xlu0 %119
  %vm121 = vcmask 519168
  %v122 = vsel %vm121, %v111, 0.0
  %123 = vadd.xlane.f32.xlu0 %v122
  %v124 = vpop.xlane.xlu0 %123
  %v125 = vrcp.pop 64.0
  %v126 = vmul.f32 64.0, %v125
  %v127 = vsub.f32 1.0, %v126
  %v128 = vmul.f32 %v125, %v127
  %v129 = vadd.f32 %v125, %v128
  %vm130 = vweird.f32 %v125
  %v131 = vsel %vm130, %v125, %v129
  %v132 = vmul.f32 %v114, %v131
  %v133 = vmul.f32 %v117, %v131
  %v134 = vmul.f32 %v120, %v131
  %v135 = vmul.f32 %v124, %v131
  %v136 = vsub.f32 %v108, %v132
  %v137 = vsub.f32 %v109, %v133
  %v138 = vsub.f32 %v110, %v134
  %v139 = vsub.f32 %v111, %v135
  %v140 = vmul.f32 %v136, %v136
  %v141 = vmul.f32 %v137, %v137
  %v142 = vmul.f32 %v138, %v138
  %v143 = vmul.f32 %v139, %v139
  %v144 = vsel %vm74, %v140, 0.0
  %145 = vadd.xlane.f32.xlu0 %v144
  %v146 = vpop.xlane.xlu0 %145
  %v147 = vsel %vm74, %v141, 0.0
  %148 = vadd.xlane.f32.xlu0 %v147
  %v149 = vpop.xlane.xlu0 %148
  %v150 = vsel %vm74, %v142, 0.0
  %151 = vadd.xlane.f32.xlu0 %v150
  %v152 = vpop.xlane.xlu0 %151
  %v153 = vsel %vm121, %v143, 0.0
  %154 = vadd.xlane.f32.xlu0 %v153
  %v155 = vpop.xlane.xlu0 %154
  %v156 = vmul.f32 %v146, %v131
  %v157 = vmul.f32 %v149, %v131
  %v158 = vmul.f32 %v152, %v131
  %v159 = vmul.f32 %v155, %v131
  %v160 = vadd.f32 %v156, 1e-05
  %v161 = vadd.f32 %v157, 1e-05
  %v162 = vadd.f32 %v158, 1e-05
  %v163 = vadd.f32 %v159, 1e-05
  %v164 = vrsqrt.pop %v160
  %v165 = vmul.f32 %v164, %v160
  %v166 = vmul.f32 %v165, %v164
  %v167 = vmul.f32 0.5, %v166
  %v168 = vsub.f32 1.5, %v167
  %v169 = vmul.f32 %v164, %v168
  %vm170 = vweird.f32 %v160
  %vm171 = vweird.f32 %v164
  %vm172 = vmor %vm170, %vm171
  %v173 = vsel %vm172, %v164, %v169
  %v174 = vrsqrt.pop %v161
  %v175 = vmul.f32 %v174, %v161
  %v176 = vmul.f32 %v175, %v174
  %v177 = vmul.f32 0.5, %v176
  %v178 = vsub.f32 1.5, %v177
  %v179 = vmul.f32 %v174, %v178
  %vm180 = vweird.f32 %v161
  %vm181 = vweird.f32 %v174
  %vm182 = vmor %vm180, %vm181
  %v183 = vsel %vm182, %v174, %v179
  %v184 = vrsqrt.pop %v162
  %v185 = vmul.f32 %v184, %v162
  %v186 = vmul.f32 %v185, %v184
  %v187 = vmul.f32 0.5, %v186
  %v188 = vsub.f32 1.5, %v187
  %v189 = vmul.f32 %v184, %v188
  %vm190 = vweird.f32 %v162
  %vm191 = vweird.f32 %v184
  %vm192 = vmor %vm190, %vm191
  %v193 = vsel %vm192, %v184, %v189
  %v194 = vrsqrt.pop %v163
  %v195 = vmul.f32 %v194, %v163
  %v196 = vmul.f32 %v195, %v194
  %v197 = vmul.f32 0.5, %v196
  %v198 = vsub.f32 1.5, %v197
  %v199 = vmul.f32 %v194, %v198
  %vm200 = vweird.f32 %v163
  %vm201 = vweird.f32 %v194
  %vm202 = vmor %vm200, %vm201
  %v203 = vsel %vm202, %v194, %v199
  %v204 = vmul.f32 %v136, %v173
  %v205 = vmul.f32 %v137, %v183
  %v206 = vmul.f32 %v138, %v193
  %v207 = vmul.f32 %v139, %v203
  %v208 = vld [vmem:[%s4] sm:$0x1]
  %v210 = vperm.slane %v208, 0
  %v212 = vmul.f32 %v204, %v210
  %v213 = vmul.f32 %v205, %v210
  %v214 = vmul.f32 %v206, %v210
  %v215 = vmul.f32 %v207, %v210
  %v216 = vld [vmem:[%s5] sm:$0x1]
  %v218 = vperm.slane %v216, 0
  %v220 = vadd.f32 %v212, %v218
  %v221 = vadd.f32 %v213, %v218
  %v222 = vadd.f32 %v214, %v218
  %v223 = vadd.f32 %v215, %v218
  %v224 = vpack.c.bf16 %v220, %v220
  %v225 = vpack.c.bf16 %v221, %v221
  %v226 = vpack.c.bf16 %v222, %v222
  %v227 = vpack.c.bf16 %v223, %v223
  %228 = vst.msk [vmem:[%s6] sm:$0xf] %vm121, %v224
  %229 = vst.msk [vmem:[%s6 + $0x4] sm:$0xf] %vm121, %v225
  %230 = vst.msk [vmem:[%s6 + $0x8] sm:$0xf] %vm121, %v226
  %vm231 = vcmask 517120
  %232 = vst.msk [vmem:[%s6 + $0xc] sm:$0x3] %vm231, %v227
  // Predicated region
  $region26: #{valle_forward.11} parent=0 // pred_check
    _
  $region27: #{valle_forward.11} parent=0 // pred_check_branch
    %234 = sbr.rel (0) target = $region29
  $region28: #{valle_forward.11} parent=0 // pred_region
    _
  $region29: #{valle_forward.11} parent=0 // pred_fallthru
    _
  // Predicated region
  $region30: #{valle_forward.11} parent=0 // pred_check
    _
  $region31: #{valle_forward.11} parent=0 // pred_check_branch
    %236 = sbr.rel (0) target = $region33
  $region32: #{valle_forward.11} parent=0 // pred_region
    _
  $region33: #{valle_forward.11} parent=0 // pred_fallthru
    _

// kernel: valle_forward.10
$region0: #{valle_forward.10}
  #allocation0 [shape = 'u32[]', space=smem, size = 0x4, offset = 0x4, fixed_abs, tag = 'smem constant byte address 0x4 - core index']
  #allocation1 [shape = 'u32[72,128]{1,0:T(1,128)}', space=vmem, size = 0x9000, scoped, tag = 'internal scratch']
  #allocation2 [shape = 's32[1]{0}', space=sflag, size = 0x4, scoped, tag = 'scoped memory for valle_forward.10']
  #allocation3 [shape = 'u8[512]{0}', space=smem, size = 0x200, scoped, tag = 'prefetched SMEM operand 0']
  %s0 = inlined_call_operand.vmem [shape: s32[2], index: 0, kind: input, shape index: {}]
  %s1 = inlined_call_operand.vmem [shape: bf16[2,4,14,16], index: 1, kind: input, shape index: {}]
  %s2 = inlined_call_operand.vmem [shape: bf16[2,4,14,16], index: 2, kind: input, shape index: {}]
  %s3 = inlined_call_operand.vmem [shape: bf16[2,4,14,16], index: 3, kind: input, shape index: {}]
  %s4 = inlined_call_operand.vmem [shape: bf16[2,4,14,16], index: 4, kind: output, shape index: {}]
  %s5 = sld [smem:[#allocation0]]
  $region45: #{valle_forward.10} parent=0
    _
  %s7 = ssub.s32 1, %s5
  %s8 = scalar_select 0, %s7, %s5
  %s10 = sshll.u32 %s0, 4
  %s11 = int_to_ptr.vmem [resolvable:$true] %s10
  %13 = dma.vmem_to_smem %s11, 16, [#allocation3], [#allocation2]
  %15 = dma.done [#allocation2], 16
  %16 = sfence
  loop: start=0, step=1, limit=4
  $region2: #{valle_forward.10} parent=0 // loop_pre_header
    _
  $region3: #{valle_forward.10} parent=0 // loop_header
    %s18 = sphi 0, %s22
    %p19 = scmp.ge.s32.totalorder %s18, 4
    %s28 = sphi 0, %s30
    %s31 = sphi 0, %s28
    %s32 = sphi 0, %s31
    %s48 = sphi 0, %s32
    %s54 = sphi 0, %s56
    %s57 = sphi 0, %s54
    %s58 = sphi 0, %s57
    %s74 = sphi 0, %s58
    %s80 = sphi 0, %s82
    %s83 = sphi 0, %s80
    %s84 = sphi 0, %s83
    %s100 = sphi 0, %s84
    %s106 = sphi 0, %s108
    %s109 = sphi 0, %s106
    %s110 = sphi 0, %s109
    %s126 = sphi 0, %s110
  $region4: #{valle_forward.10} parent=0 // loop_header_branch
    %21 = sbr.rel (%p19) target = $region8
  $region5: #{valle_forward.10} parent=0 // loop_body
    %s23 = ssub.s32 %s18, 1
    %s24 = ssub.s32 %s18, 2
    %s25 = sadd.s32 %s18, 1
    %s26 = ssub.s32 %s18, %s25
    %p27 = scmp.eq.s32.totalorder %s26, 0
    %s29 = sadd.s32 %s28, 1
    %s30 = scalar_select %p27, %s28, %s29
    %p33 = pneg %p27
    %p34 = scmp.eq.s32.totalorder %s18, 1
    %p35 = por %p33, %p34
    %p36 = scmp.ne.s32.totalorder %s28, %s31
    %p37 = scmp.eq.s32.totalorder %s18, 0
    %p38 = por %p36, %p37
    %p39 = scmp.ne.s32.totalorder %s28, %s31
    %p40 = scmp.eq.s32.totalorder %s23, 1
    %p41 = por %p39, %p40
    %p42 = scmp.ne.s32.totalorder %s31, %s32
    %p43 = scmp.eq.s32.totalorder %s23, 0
    %p44 = por %p42, %p43
    %p45 = scmp.ne.s32.totalorder %s31, %s32
    %p46 = scmp.eq.s32.totalorder %s24, 1
    %p47 = por %p45, %p46
    %p49 = scmp.ne.s32.totalorder %s32, %s48
    %p50 = scmp.eq.s32.totalorder %s24, 0
    %p51 = por %p49, %p50
    %s52 = ssub.s32 %s18, %s25
    %p53 = scmp.eq.s32.totalorder %s52, 0
    %s55 = sadd.s32 %s54, 1
    %s56 = scalar_select %p53, %s54, %s55
    %p59 = pneg %p53
    %p60 = scmp.eq.s32.totalorder %s18, 1
    %p61 = por %p59, %p60
    %p62 = scmp.ne.s32.totalorder %s54, %s57
    %p63 = scmp.eq.s32.totalorder %s18, 0
    %p64 = por %p62, %p63
    %p65 = scmp.ne.s32.totalorder %s54, %s57
    %p66 = scmp.eq.s32.totalorder %s23, 1
    %p67 = por %p65, %p66
    %p68 = scmp.ne.s32.totalorder %s57, %s58
    %p69 = scmp.eq.s32.totalorder %s23, 0
    %p70 = por %p68, %p69
    %p71 = scmp.ne.s32.totalorder %s57, %s58
    %p72 = scmp.eq.s32.totalorder %s24, 1
    %p73 = por %p71, %p72
    %p75 = scmp.ne.s32.totalorder %s58, %s74
    %p76 = scmp.eq.s32.totalorder %s24, 0
    %p77 = por %p75, %p76
    %s78 = ssub.s32 %s18, %s25
    %p79 = scmp.eq.s32.totalorder %s78, 0
    %s81 = sadd.s32 %s80, 1
    %s82 = scalar_select %p79, %s80, %s81
    %p85 = pneg %p79
    %p86 = scmp.eq.s32.totalorder %s18, 1
    %p87 = por %p85, %p86
    %p88 = scmp.ne.s32.totalorder %s80, %s83
    %p89 = scmp.eq.s32.totalorder %s18, 0
    %p90 = por %p88, %p89
    %p91 = scmp.ne.s32.totalorder %s80, %s83
    %p92 = scmp.eq.s32.totalorder %s23, 1
    %p93 = por %p91, %p92
    %p94 = scmp.ne.s32.totalorder %s83, %s84
    %p95 = scmp.eq.s32.totalorder %s23, 0
    %p96 = por %p94, %p95
    %p97 = scmp.ne.s32.totalorder %s83, %s84
    %p98 = scmp.eq.s32.totalorder %s24, 1
    %p99 = por %p97, %p98
    %p101 = scmp.ne.s32.totalorder %s84, %s100
    %p102 = scmp.eq.s32.totalorder %s24, 0
    %p103 = por %p101, %p102
    %s104 = ssub.s32 %s18, %s25
    %p105 = scmp.eq.s32.totalorder %s104, 0
    %s107 = sadd.s32 %s106, 1
    %s108 = scalar_select %p105, %s106, %s107
    %p111 = pneg %p105
    %p112 = scmp.eq.s32.totalorder %s18, 1
    %p113 = por %p111, %p112
    %p114 = scmp.ne.s32.totalorder %s106, %s109
    %p115 = scmp.eq.s32.totalorder %s18, 0
    %p116 = por %p114, %p115
    %p117 = scmp.ne.s32.totalorder %s106, %s109
    %p118 = scmp.eq.s32.totalorder %s23, 1
    %p119 = por %p117, %p118
    %p120 = scmp.ne.s32.totalorder %s109, %s110
    %p121 = scmp.eq.s32.totalorder %s23, 0
    %p122 = por %p120, %p121
    %p123 = scmp.ne.s32.totalorder %s109, %s110
    %p124 = scmp.eq.s32.totalorder %s24, 1
    %p125 = por %p123, %p124
    %p127 = scmp.ne.s32.totalorder %s110, %s126
    %p128 = scmp.eq.s32.totalorder %s24, 0
    %p129 = por %p127, %p128
    %p130 = scmp.le.s32.totalorder 1, %s18
    %p131 = scmp.lt.s32.totalorder %s18, 3
    %p132 = pnand %p130, %p131
    %p133 = pneg %p132
    // Predicated region
    $region9: #{valle_forward.10} parent=5 // pred_check
      _
    $region10: #{valle_forward.10} parent=5 // pred_check_branch
      %135 = sbr.rel (%p132) target = $region12
    $region11: #{valle_forward.10} parent=5 // pred_region
      %s136 = ssub.s32 %s18, 1
    $region12: #{valle_forward.10} parent=5 // pred_fallthru
      _
    %p137 = scmp.lt.s32.totalorder %s18, 2
    // Predicated region
    $region13: #{valle_forward.10} parent=5 // pred_check
      %p138 = pneg %p137
    $region14: #{valle_forward.10} parent=5 // pred_check_branch
      %140 = sbr.rel (%p138) target = $region16
    $region15: #{valle_forward.10} parent=5 // pred_region
      // Predicated region
      $region17: #{valle_forward.10} parent=15 // pred_check
        %p141 = pneg %p38
      $region18: #{valle_forward.10} parent=15 // pred_check_branch
        %143 = sbr.rel (%p141) target = $region20
      $region19: #{valle_forward.10} parent=15 // pred_region
        %p144 = scmp.lt.s32.totalorder %s18, 1
        %s145 = scalar_select %p144, %s18, 1
        %s146 = smul.addr %s145, 8
        %s147 = smul.addr %s146, 4
        %s148 = scalar_lea.vmem %s1, %s147
      $region20: #{valle_forward.10} parent=15 // pred_fallthru
        _
      // Predicated region
      $region21: #{valle_forward.10} parent=15 // pred_check
        %p149 = pneg %p64
      $region22: #{valle_forward.10} parent=15 // pred_check_branch
        %151 = sbr.rel (%p149) target = $region24
      $region23: #{valle_forward.10} parent=15 // pred_region
        %p152 = scmp.lt.s32.totalorder %s18, 1
        %s153 = scalar_select %p152, %s18, 1
        %s154 = smul.addr %s153, 8
        %s155 = smul.addr %s154, 4
        %s156 = scalar_lea.vmem %s2, %s155
      $region24: #{valle_forward.10} parent=15 // pred_fallthru
        _
      // Predicated region
      $region25: #{valle_forward.10} parent=15 // pred_check
        %p157 = pneg %p90
      $region26: #{valle_forward.10} parent=15 // pred_check_branch
        %159 = sbr.rel (%p157) target = $region28
      $region27: #{valle_forward.10} parent=15 // pred_region
        %p160 = scmp.lt.s32.totalorder %s18, 1
        %s161 = scalar_select %p160, %s18, 1
        %s162 = smul.addr %s161, 8
        %s163 = smul.addr %s162, 4
        %s164 = scalar_lea.vmem %s3, %s163
      $region28: #{valle_forward.10} parent=15 // pred_fallthru
        _
    $region16: #{valle_forward.10} parent=5 // pred_fallthru
      _
    %p165 = scmp.le.s32.totalorder 1, %s18
    %p166 = scmp.lt.s32.totalorder %s18, 3
    %p167 = pnand %p165, %p166
    %p168 = pneg %p167
    // Predicated region
    $region29: #{valle_forward.10} parent=5 // pred_check
      _
    $region30: #{valle_forward.10} parent=5 // pred_check_branch
      %170 = sbr.rel (%p167) target = $region32
    $region31: #{valle_forward.10} parent=5 // pred_region
      %s171 = ssub.s32 %s18, 1
      %p172 = scmp.lt.s32.totalorder %s23, 1
      %s173 = scalar_select %p172, %s23, 1
      %s174 = smul.addr %s173, 8
      %s175 = smul.addr %s174, 4
      %s176 = scalar_lea.vmem %s1, %s175
      %p177 = pneg %p44
      %p178 = pneg %p41
      %p179 = scmp.lt.s32.totalorder %s23, 1
      %s180 = scalar_select %p179, %s23, 1
      %s181 = smul.addr %s180, 8
      %s182 = smul.addr %s181, 4
      %s183 = scalar_lea.vmem %s2, %s182
      %p184 = pneg %p70
      %p185 = pneg %p67
      %p186 = scmp.lt.s32.totalorder %s23, 1
      %s187 = scalar_select %p186, %s23, 1
      %s188 = smul.addr %s187, 8
      %s189 = smul.addr %s188, 4
      %s190 = scalar_lea.vmem %s3, %s189
      %p191 = pneg %p96
      %p192 = pneg %p93
      %p193 = pneg %p122
      %p194 = pneg %p119
      %p195 = scmp.lt.s32.totalorder %s23, 1
      %s196 = scalar_select %p195, %s23, 1
      %s197 = smul.addr %s196, 8
      %s198 = smul.addr %s197, 4
      %s199 = scalar_lea.vmem %s4, %s198
      %p200 = scmp.lt.s32.totalorder %s23, 1
      %s201 = scalar_select %p200, %s23, 1
      %s202 = smul.addr %s201, 8
      %s203 = smul.addr %s202, 4
      %s204 = scalar_lea.vmem %s1, %s203
      %p205 = scmp.lt.s32.totalorder %s23, 1
      %s206 = scalar_select %p205, %s23, 1
      %s207 = smul.addr %s206, 8
      %s208 = smul.addr %s207, 4
      %s209 = scalar_lea.vmem %s2, %s208
      %p210 = scmp.lt.s32.totalorder %s23, 1
      %s211 = scalar_select %p210, %s23, 1
      %s212 = smul.addr %s211, 8
      %s213 = smul.addr %s212, 4
      %s214 = scalar_lea.vmem %s3, %s213
      %p215 = scmp.lt.s32.totalorder %s23, 1
      %s216 = scalar_select %p215, %s23, 1
      %s217 = smul.addr %s216, 8
      %s218 = smul.addr %s217, 4
      %s219 = scalar_lea.vmem %s4, %s218
      %s221 = sld [smem:[#allocation3 + %s23]]
      %v222 = vld [vmem:[%s204] sm:$0xf]
      %v223 = vld [vmem:[%s204 + $0x4] sm:$0x7]
      %v224 = vld [vmem:[%s204 + $0x8] sm:$0xf]
      %v225 = vld [vmem:[%s204 + $0xc] sm:$0x7]
      %v226 = vld [vmem:[%s204 + $0x10] sm:$0xf]
      %v227 = vld [vmem:[%s204 + $0x14] sm:$0x7]
      %v228 = vld [vmem:[%s204 + $0x18] sm:$0xf]
      %v229 = vld [vmem:[%s204 + $0x1c] sm:$0x7]
      %v230 = vld [vmem:[%s209] sm:$0xf]
      %v231 = vld [vmem:[%s209 + $0x4] sm:$0x7]
      %v232 = vld [vmem:[%s209 + $0x8] sm:$0xf]
      %v233 = vld [vmem:[%s209 + $0xc] sm:$0x7]
      %v234 = vld [vmem:[%s209 + $0x10] sm:$0xf]
      %v235 = vld [vmem:[%s209 + $0x14] sm:$0x7]
      %v236 = vld [vmem:[%s209 + $0x18] sm:$0xf]
      %v237 = vld [vmem:[%s209 + $0x1c] sm:$0x7]
      %v238 = vld [vmem:[%s214] sm:$0xf]
      %v239 = vld [vmem:[%s214 + $0x4] sm:$0x7]
      %v240 = vld [vmem:[%s214 + $0x8] sm:$0xf]
      %v241 = vld [vmem:[%s214 + $0xc] sm:$0x7]
      %v242 = vld [vmem:[%s214 + $0x10] sm:$0xf]
      %v243 = vld [vmem:[%s214 + $0x14] sm:$0x7]
      %v244 = vld [vmem:[%s214 + $0x18] sm:$0xf]
      %v245 = vld [vmem:[%s214 + $0x1c] sm:$0x7]
      %v246 = vlaneseq
      %v247 = vshrl.u32 %v246, 7
      %v248 = vadd.s32 %v247, 8
      %v249 = vlaneseq
      %v250 = vand.u32 %v249, 127
      %vm251 = vcmp.gt.s32.totalorder %v250, %v247
      %vm252 = vcmp.gt.s32.totalorder %v250, %v248
      %v253 = vstv %s221
      %vm254 = vcmp.ge.s32.totalorder %v250, %v253
      %vm255 = vmor %vm251, %vm254
      %vm256 = vmor %vm252, %vm254
      %v257 = vsel %vm255, -1e+09, 0.0
      %v258 = vsel %vm256, -1e+09, 0.0
      %v261 = vunpack.c.l.b16 %v222
      %v262 = vunpack.c.l.b16 %v223
      %v263 = vpack.c.b16 %v262, %v261
      %v266 = vunpack.c.l.b16 %v230
      %v267 = vunpack.c.l.b16 %v231
      %v268 = vpack.c.b16 %v267, %v266
      %vm269 = vcmask 130048
      %v271 = vsel %vm269, %v263, 0
      %v274 = vsel %vm269, %v268, 0
      %276 = vmatpush.bf16.xpose.msra.mxu0 0
      %277 = vmatpush.bf16.xpose.msra.mxu0 0
      %278 = vmatpush.bf16.xpose.msra.mxu0 0
      %279 = vmatpush.bf16.xpose.msra.mxu0 0
      %280 = vmatpush.bf16.xpose.msra.mxu0 0
      %281 = vmatpush.bf16.xpose.msra.mxu0 0
      %282 = vmatpush.bf16.xpose.msra.mxu0 0
      %283 = vmatpush.bf16.xpose.msra.mxu0 %v274
      %284 = vmatmul.bf16.gmra.mxu0 %v271
      %v285 = vpop.f32.mrf.mxu0
      %v286 = vadd.f32 0.0, %v285
      %v287 = vpop.f32.mrf.mxu0
      %v288 = vadd.f32 0.0, %v287
      %289 = vdwg.mxu0
      %v292 = vunpack.c.l.b16 %v224
      %v293 = vunpack.c.l.b16 %v225
      %v294 = vpack.c.b16 %v293, %v292
      %v297 = vunpack.c.l.b16 %v232
      %v298 = vunpack.c.l.b16 %v233
      %v299 = vpack.c.b16 %v298, %v297
      %v301 = vsel %vm269, %v294, 0
      %v304 = vsel %vm269, %v299, 0
      %306 = vmatpush.bf16.xpose.msra.mxu0 0
      %307 = vmatpush.bf16.xpose.msra.mxu0 0
      %308 = vmatpush.bf16.xpose.msra.mxu0 0
      %309 = vmatpush.bf16.xpose.msra.mxu0 0
      %310 = vmatpush.bf16.xpose.msra.mxu0 0
      %311 = vmatpush.bf16.xpose.msra.mxu0 0
      %312 = vmatpush.bf16.xpose.msra.mxu0 0
      %313 = vmatpush.bf16.xpose.msra.mxu0 %v304
      %314 = vmatmul.bf16.gmra.mxu0 %v301
      %v315 = vpop.f32.mrf.mxu0
      %v316 = vadd.f32 0.0, %v315
      %v317 = vpop.f32.mrf.mxu0
      %v318 = vadd.f32 0.0, %v317
      %319 = vdwg.mxu0
      %v322 = vunpack.c.l.b16 %v226
      %v323 = vunpack.c.l.b16 %v227
      %v324 = vpack.c.b16 %v323, %v322
      %v327 = vunpack.c.l.b16 %v234
      %v328 = vunpack.c.l.b16 %v235
      %v329 = vpack.c.b16 %v328, %v327
      %v331 = vsel %vm269, %v324, 0
      %v334 = vsel %vm269, %v329, 0
      %336 = vmatpush.bf16.xpose.msra.mxu0 0
      %337 = vmatpush.bf16.xpose.msra.mxu0 0
      %338 = vmatpush.bf16.xpose.msra.mxu0 0
      %339 = vmatpush.bf16.xpose.msra.mxu0 0
      %340 = vmatpush.bf16.xpose.msra.mxu0 0
      %341 = vmatpush.bf16.xpose.msra.mxu0 0
      %342 = vmatpush.bf16.xpose.msra.mxu0 0
      %343 = vmatpush.bf16.xpose.msra.mxu0 %v334
      %344 = vmatmul.bf16.gmra.mxu0 %v331
      %v345 = vpop.f32.mrf.mxu0
      %v346 = vadd.f32 0.0, %v345
      %v347 = vpop.f32.mrf.mxu0
      %v348 = vadd.f32 0.0, %v347
      %349 = vdwg.mxu0
      %v352 = vunpack.c.l.b16 %v228
      %v353 = vunpack.c.l.b16 %v229
      %v354 = vpack.c.b16 %v353, %v352
      %v357 = vunpack.c.l.b16 %v236
      %v358 = vunpack.c.l.b16 %v237
      %v359 = vpack.c.b16 %v358, %v357
      %v361 = vsel %vm269, %v354, 0
      %v364 = vsel %vm269, %v359, 0
      %366 = vmatpush.bf16.xpose.msra.mxu0 0
      %367 = vmatpush.bf16.xpose.msra.mxu0 0
      %368 = vmatpush.bf16.xpose.msra.mxu0 0
      %369 = vmatpush.bf16.xpose.msra.mxu0 0
      %370 = vmatpush.bf16.xpose.msra.mxu0 0
      %371 = vmatpush.bf16.xpose.msra.mxu0 0
      %372 = vmatpush.bf16.xpose.msra.mxu0 0
      %373 = vmatpush.bf16.xpose.msra.mxu0 %v364
      %374 = vmatmul.bf16.gmra.mxu0 %v361
      %v375 = vpop.f32.mrf.mxu0
      %v376 = vadd.f32 0.0, %v375
      %v377 = vpop.f32.mrf.mxu0
      %v378 = vadd.f32 0.0, %v377
      %379 = vdwg.mxu0
      %v380 = vmul.f32 %v286, 0.25
      %v381 = vmul.f32 %v288, 0.25
      %v382 = vmul.f32 %v316, 0.25
      %v383 = vmul.f32 %v318, 0.25
      %v384 = vmul.f32 %v346, 0.25
      %v385 = vmul.f32 %v348, 0.25
      %v386 = vmul.f32 %v376, 0.25
      %v387 = vmul.f32 %v378, 0.25
      %v388 = vadd.f32 %v380, %v257
      %v389 = vadd.f32 %v381, %v258
      %v390 = vadd.f32 %v382, %v257
      %v391 = vadd.f32 %v383, %v258
      %v392 = vadd.f32 %v384, %v257
      %v393 = vadd.f32 %v385, %v258
      %v394 = vadd.f32 %v386, %v257
      %v395 = vadd.f32 %v387, %v258
      %vm396 = vcmask 113664
      %v397 = vsel %vm396, %v388, -inf
      %398 = vmax.xlane.f32.xlu0 %v397
      %v399 = vpop.xlane.xlu0 %398
      %vm400 = vcmask 111616
      %v401 = vsel %vm400, %v389, -inf
      %402 = vmax.xlane.f32.xlu0 %v401
      %v403 = vpop.xlane.xlu0 %402
      %v404 = vsel %vm396, %v390, -inf
      %405 = vmax.xlane.f32.xlu0 %v404
      %v406 = vpop.xlane.xlu0 %405
      %v407 = vsel %vm400, %v391, -inf
      %408 = vmax.xlane.f32.xlu0 %v407
      %v409 = vpop.xlane.xlu0 %408
      %v410 = vsel %vm396, %v392, -inf
      %411 = vmax.xlane.f32.xlu0 %v410
      %v412 = vpop.xlane.xlu0 %411
      %v413 = vsel %vm400, %v393, -inf
      %414 = vmax.xlane.f32.xlu0 %v413
      %v415 = vpop.xlane.xlu0 %414
      %v416 = vsel %vm396, %v394, -inf
      %417 = vmax.xlane.f32.xlu0 %v416
      %v418 = vpop.xlane.xlu0 %417
      %v419 = vsel %vm400, %v395, -inf
      %420 = vmax.xlane.f32.xlu0 %v419
      %v421 = vpop.xlane.xlu0 %420
      %v422 = vsub.f32 %v388, %v399
      %v423 = vsub.f32 %v389, %v403
      %v424 = vsub.f32 %v390, %v406
      %v425 = vsub.f32 %v391, %v409
      %v426 = vsub.f32 %v392, %v412
      %v427 = vsub.f32 %v393, %v415
      %v428 = vsub.f32 %v394, %v418
      %v429 = vsub.f32 %v395, %v421
      %v430 = vmul.f32 %v422, 1.442695
      %v431 = vpow.pop %v430
      %v432 = vmul.f32 %v423, 1.442695
      %v433 = vpow.pop %v432
      %v434 = vmul.f32 %v424, 1.442695
      %v435 = vpow.pop %v434
      %v436 = vmul.f32 %v425, 1.442695
      %v437 = vpow.pop %v436
      %v438 = vmul.f32 %v426, 1.442695
      %v439 = vpow.pop %v438
      %v440 = vmul.f32 %v427, 1.442695
      %v441 = vpow.pop %v440
      %v442 = vmul.f32 %v428, 1.442695
      %v443 = vpow.pop %v442
      %v444 = vmul.f32 %v429, 1.442695
      %v445 = vpow.pop %v444
      %v446 = vsel %vm396, %v431, 0.0
      %447 = vadd.xlane.f32.xlu0 %v446
      %v448 = vpop.xlane.xlu0 %447
      %v449 = vsel %vm400, %v433, 0.0
      %450 = vadd.xlane.f32.xlu0 %v449
      %v451 = vpop.xlane.xlu0 %450
      %v452 = vsel %vm396, %v435, 0.0
      %453 = vadd.xlane.f32.xlu0 %v452
      %v454 = vpop.xlane.xlu0 %453
      %v455 = vsel %vm400, %v437, 0.0
      %456 = vadd.xlane.f32.xlu0 %v455
      %v457 = vpop.xlane.xlu0 %456
      %v458 = vsel %vm396, %v439, 0.0
      %459 = vadd.xlane.f32.xlu0 %v458
      %v460 = vpop.xlane.xlu0 %459
      %v461 = vsel %vm400, %v441, 0.0
      %462 = vadd.xlane.f32.xlu0 %v461
      %v463 = vpop.xlane.xlu0 %462
      %v464 = vsel %vm396, %v443, 0.0
      %465 = vadd.xlane.f32.xlu0 %v464
      %v466 = vpop.xlane.xlu0 %465
      %v467 = vsel %vm400, %v445, 0.0
      %468 = vadd.xlane.f32.xlu0 %v467
      %v469 = vpop.xlane.xlu0 %468
      %v470 = vrcp.pop %v448
      %v471 = vrcp.pop %v451
      %v472 = vrcp.pop %v454
      %v473 = vrcp.pop %v457
      %v474 = vrcp.pop %v460
      %v475 = vrcp.pop %v463
      %v476 = vrcp.pop %v466
      %v477 = vrcp.pop %v469
      %v478 = vmul.f32 %v431, %v470
      %v479 = vmul.f32 %v433, %v471
      %v480 = vmul.f32 %v435, %v472
      %v481 = vmul.f32 %v437, %v473
      %v482 = vmul.f32 %v439, %v474
      %v483 = vmul.f32 %v441, %v475
      %v484 = vmul.f32 %v443, %v476
      %v485 = vmul.f32 %v445, %v477
      %v486 = vpack.c.bf16 %v478, %v478
      %v487 = vpack.c.bf16 %v479, %v479
      %v488 = vpack.c.bf16 %v480, %v480
      %v489 = vpack.c.bf16 %v481, %v481
      %v490 = vpack.c.bf16 %v482, %v482
      %v491 = vpack.c.bf16 %v483, %v483
      %v492 = vpack.c.bf16 %v484, %v484
      %v493 = vpack.c.bf16 %v485, %v485
      %v496 = vunpack.c.l.b16 %v486
      %v497 = vunpack.c.l.b16 %v487
      %v498 = vpack.c.b16 %v497, %v496
      %v501 = vunpack.c.l.b16 %v238
      %v502 = vunpack.c.l.b16 %v239
      %v503 = vpack.c.b16 %v502, %v501
      %v505 = vsel %vm396, %v498, 0
      %vm507 = vcmask 1046528
      %v509 = vsel %vm507, %v503, 0
      %511 = vmatpush.bf16.msra.mxu0 0
      %512 = vmatpush.bf16.msra.mxu0 0
      %513 = vmatpush.bf16.msra.mxu0 0
      %514 = vmatpush.bf16.msra.mxu0 0
      %515 = vmatpush.bf16.msra.mxu0 0
      %516 = vmatpush.bf16.msra.mxu0 0
      %517 = vmatpush.bf16.msra.mxu0 0
      %518 = vmatpush.bf16.msra.mxu0 %v509
      %519 = vmatmul.bf16.gmra.mxu0 %v505
      %v520 = vpop.f32.mrf.mxu0
      %v521 = vadd.f32 0.0, %v520
      %v522 = vpop.f32.mrf.mxu0
      %v523 = vadd.f32 0.0, %v522
      %524 = vdwg.mxu0
      %v527 = vunpack.c.l.b16 %v488
      %v528 = vunpack.c.l.b16 %v489
      %v529 = vpack.c.b16 %v528, %v527
      %v532 = vunpack.c.l.b16 %v240
      %v533 = vunpack.c.l.b16 %v241
      %v534 = vpack.c.b16 %v533, %v532
      %v536 = vsel %vm396, %v529, 0
      %v539 = vsel %vm507, %v534, 0
      %541 = vmatpush.bf16.msra.mxu0 0
      %542 = vmatpush.bf16.msra.mxu0 0
      %543 = vmatpush.bf16.msra.mxu0 0
      %544 = vmatpush.bf16.msra.mxu0 0
      %545 = vmatpush.bf16.msra.mxu0 0
      %546 = vmatpush.bf16.msra.mxu0 0
      %547 = vmatpush.bf16.msra.mxu0 0
      %548 = vmatpush.bf16.msra.mxu0 %v539
      %549 = vmatmul.bf16.gmra.mxu0 %v536
      %v550 = vpop.f32.mrf.mxu0
      %v551 = vadd.f32 0.0, %v550
      %v552 = vpop.f32.mrf.mxu0
      %v553 = vadd.f32 0.0, %v552
      %554 = vdwg.mxu0
      %v557 = vunpack.c.l.b16 %v490
      %v558 = vunpack.c.l.b16 %v491
      %v559 = vpack.c.b16 %v558, %v557
      %v562 = vunpack.c.l.b16 %v242
      %v563 = vunpack.c.l.b16 %v243
      %v564 = vpack.c.b16 %v563, %v562
      %v566 = vsel %vm396, %v559, 0
      %v569 = vsel %vm507, %v564, 0
      %571 = vmatpush.bf16.msra.mxu0 0
      %572 = vmatpush.bf16.msra.mxu0 0
      %573 = vmatpush.bf16.msra.mxu0 0
      %574 = vmatpush.bf16.msra.mxu0 0
      %575 = vmatpush.bf16.msra.mxu0 0
      %576 = vmatpush.bf16.msra.mxu0 0
      %577 = vmatpush.bf16.msra.mxu0 0
      %578 = vmatpush.bf16.msra.mxu0 %v569
      %579 = vmatmul.bf16.gmra.mxu0 %v566
      %v580 = vpop.f32.mrf.mxu0
      %v581 = vadd.f32 0.0, %v580
      %v582 = vpop.f32.mrf.mxu0
      %v583 = vadd.f32 0.0, %v582
      %584 = vdwg.mxu0
      %v587 = vunpack.c.l.b16 %v492
      %v588 = vunpack.c.l.b16 %v493
      %v589 = vpack.c.b16 %v588, %v587
      %v592 = vunpack.c.l.b16 %v244
      %v593 = vunpack.c.l.b16 %v245
      %v594 = vpack.c.b16 %v593, %v592
      %v596 = vsel %vm396, %v589, 0
      %v599 = vsel %vm507, %v594, 0
      %601 = vmatpush.bf16.msra.mxu0 0
      %602 = vmatpush.bf16.msra.mxu0 0
      %603 = vmatpush.bf16.msra.mxu0 0
      %604 = vmatpush.bf16.msra.mxu0 0
      %605 = vmatpush.bf16.msra.mxu0 0
      %606 = vmatpush.bf16.msra.mxu0 0
      %607 = vmatpush.bf16.msra.mxu0 0
      %608 = vmatpush.bf16.msra.mxu0 %v599
      %609 = vmatmul.bf16.gmra.mxu0 %v596
      %v610 = vpop.f32.mrf.mxu0
      %v611 = vadd.f32 0.0, %v610
      %v612 = vpop.f32.mrf.mxu0
      %v613 = vadd.f32 0.0, %v612
      %614 = vdwg.mxu0
      %vm615 = vcmp.lt.s32.totalorder %v247, %v253
      %vm616 = vcmp.lt.s32.totalorder %v248, %v253
      %v617 = vsel %vm615, 1, 0
      %v618 = vsel %vm616, 1, 0
      %v619 = vcvt.s32.f32 %v617
      %v620 = vcvt.s32.f32 %v618
      %v621 = vmul.f32 %v521, %v619
      %v622 = vmul.f32 %v523, %v620
      %v623 = vmul.f32 %v551, %v619
      %v624 = vmul.f32 %v553, %v620
      %v625 = vmul.f32 %v581, %v619
      %v626 = vmul.f32 %v583, %v620
      %v627 = vmul.f32 %v611, %v619
      %v628 = vmul.f32 %v613, %v620
      %v629 = vpack.c.bf16 %v621, %v621
      %v630 = vpack.c.bf16 %v622, %v622
      %v631 = vpack.c.bf16 %v623, %v623
      %v632 = vpack.c.bf16 %v624, %v624
      %v633 = vpack.c.bf16 %v625, %v625
      %v634 = vpack.c.bf16 %v626, %v626
      %v635 = vpack.c.bf16 %v627, %v627
      %v636 = vpack.c.bf16 %v628, %v628
      %vm637 = vcmask 125952
      %638 = vst.msk [vmem:[%s219] sm:$0xf] %vm637, %v629
      %vm639 = vcmask 124928
      %640 = vst.msk [vmem:[%s219 + $0x4] sm:$0x7] %vm639, %v630
      %641 = vst.msk [vmem:[%s219 + $0x8] sm:$0xf] %vm637, %v631
      %642 = vst.msk [vmem:[%s219 + $0xc] sm:$0x7] %vm639, %v632
      %643 = vst.msk [vmem:[%s219 + $0x10] sm:$0xf] %vm637, %v633
      %644 = vst.msk [vmem:[%s219 + $0x14] sm:$0x7] %vm639, %v634
      %645 = vst.msk [vmem:[%s219 + $0x18] sm:$0xf] %vm637, %v635
      %646 = vst.msk [vmem:[%s219 + $0x1c] sm:$0x7] %vm639, %v636
      %p647 = scmp.lt.s32.totalorder %s23, 1
      %s648 = scalar_select %p647, %s23, 1
      %s649 = smul.addr %s648, 8
      %s650 = smul.addr %s649, 4
      %s651 = scalar_lea.vmem %s4, %s650
      // Predicated region
      $region33: #{valle_forward.10} parent=31 // pred_check
        %p652 = pneg %p119
      $region34: #{valle_forward.10} parent=31 // pred_check_branch
        %654 = sbr.rel (%p652) target = $region36
      $region35: #{valle_forward.10} parent=31 // pred_region
        _
      $region36: #{valle_forward.10} parent=31 // pred_fallthru
        _
    $region32: #{valle_forward.10} parent=5 // pred_fallthru
      _
    %p655 = scmp.le.s32.totalorder 2, %s18
    // Predicated region
    $region37: #{valle_forward.10} parent=5 // pred_check
      %p656 = pneg %p655
    $region38: #{valle_forward.10} parent=5 // pred_check_branch
      %658 = sbr.rel (%p656) target = $region40
    $region39: #{valle_forward.10} parent=5 // pred_region
      %s659 = ssub.s32 %s18, 2
      // Predicated region
      $region41: #{valle_forward.10} parent=39 // pred_check
        %p660 = pneg %p125
      $region42: #{valle_forward.10} parent=39 // pred_check_branch
        %662 = sbr.rel (%p660) target = $region44
      $region43: #{valle_forward.10} parent=39 // pred_region
        %p663 = scmp.lt.s32.totalorder %s24, 1
        %s664 = scalar_select %p663, %s24, 1
        %s665 = smul.addr %s664, 8
        %s666 = smul.addr %s665, 4
        %s667 = scalar_lea.vmem %s4, %s666
      $region44: #{valle_forward.10} parent=39 // pred_fallthru
        _
    $region40: #{valle_forward.10} parent=5 // pred_fallthru
      _
  $region6: #{valle_forward.10} parent=0 // loop_footer
    %s22 = sadd.s32 1, %s18
  $region7: #{valle_forward.10} parent=0 // loop_footer_branch
    %17 = sbr.rel target = $region3
  $region8: #{valle_forward.10} parent=0 // loop_exit
    _

// kernel: valle_forward.12
$region0: #{valle_forward.12}
  #allocation0 [shape = 'u32[]', space=smem, size = 0x4, offset = 0x4, fixed_abs, tag = 'smem constant byte address 0x4 - core index']
  #allocation1 [shape = 'u32[72,128]{1,0:T(1,128)}', space=vmem, size = 0x9000, scoped, tag = 'internal scratch']
  %s0 = inlined_call_operand.vmem [shape: bf16[28,64], index: 0, kind: input, shape index: {}]
  %s1 = inlined_call_operand.vmem [shape: bf16[64,128], index: 1, kind: input, shape index: {}]
  %s2 = inlined_call_operand.vmem [shape: f32[1,128], index: 2, kind: input, shape index: {}]
  %s3 = inlined_call_operand.vmem [shape: bf16[128,64], index: 3, kind: input, shape index: {}]
  %s4 = inlined_call_operand.vmem [shape: f32[1,64], index: 4, kind: input, shape index: {}]
  %s5 = inlined_call_operand.vmem [shape: f32[1,64], index: 5, kind: input, shape index: {}]
  %s6 = inlined_call_operand.vmem [shape: f32[1,64], index: 6, kind: input, shape index: {}]
  %s7 = inlined_call_operand.vmem [shape: bf16[28,64], index: 7, kind: output, shape index: {}]
  %s8 = sld [smem:[#allocation0]]
  $region38: #{valle_forward.12} parent=0
    _
  %s10 = ssub.s32 1, %s8
  %s11 = scalar_select 0, %s10, %s8
  // Predicated region
  $region2: #{valle_forward.12} parent=0 // pred_check
    _
  $region3: #{valle_forward.12} parent=0 // pred_check_branch
    %13 = sbr.rel (0) target = $region5
  $region4: #{valle_forward.12} parent=0 // pred_region
    _
  $region5: #{valle_forward.12} parent=0 // pred_fallthru
    _
  // Predicated region
  $region6: #{valle_forward.12} parent=0 // pred_check
    _
  $region7: #{valle_forward.12} parent=0 // pred_check_branch
    %15 = sbr.rel (0) target = $region9
  $region8: #{valle_forward.12} parent=0 // pred_region
    _
  $region9: #{valle_forward.12} parent=0 // pred_fallthru
    _
  // Predicated region
  $region10: #{valle_forward.12} parent=0 // pred_check
    _
  $region11: #{valle_forward.12} parent=0 // pred_check_branch
    %17 = sbr.rel (0) target = $region13
  $region12: #{valle_forward.12} parent=0 // pred_region
    _
  $region13: #{valle_forward.12} parent=0 // pred_fallthru
    _
  // Predicated region
  $region14: #{valle_forward.12} parent=0 // pred_check
    _
  $region15: #{valle_forward.12} parent=0 // pred_check_branch
    %19 = sbr.rel (0) target = $region17
  $region16: #{valle_forward.12} parent=0 // pred_region
    _
  $region17: #{valle_forward.12} parent=0 // pred_fallthru
    _
  // Predicated region
  $region18: #{valle_forward.12} parent=0 // pred_check
    _
  $region19: #{valle_forward.12} parent=0 // pred_check_branch
    %21 = sbr.rel (0) target = $region21
  $region20: #{valle_forward.12} parent=0 // pred_region
    _
  $region21: #{valle_forward.12} parent=0 // pred_fallthru
    _
  // Predicated region
  $region22: #{valle_forward.12} parent=0 // pred_check
    _
  $region23: #{valle_forward.12} parent=0 // pred_check_branch
    %23 = sbr.rel (0) target = $region25
  $region24: #{valle_forward.12} parent=0 // pred_region
    _
  $region25: #{valle_forward.12} parent=0 // pred_fallthru
    _
  // Predicated region
  $region26: #{valle_forward.12} parent=0 // pred_check
    _
  $region27: #{valle_forward.12} parent=0 // pred_check_branch
    %25 = sbr.rel (0) target = $region29
  $region28: #{valle_forward.12} parent=0 // pred_region
    _
  $region29: #{valle_forward.12} parent=0 // pred_fallthru
    _
  %v27 = vld [vmem:[%s0] sm:$0xf]
  %v28 = vld [vmem:[%s0 + $0x4] sm:$0xf]
  %v29 = vld [vmem:[%s0 + $0x8] sm:$0xf]
  %v30 = vld [vmem:[%s0 + $0xc] sm:$0x3]
  %v31 = vunpack.c.l.bf16 %v27
  %v32 = vunpack.c.l.bf16 %v28
  %v33 = vunpack.c.l.bf16 %v29
  %v34 = vunpack.c.l.bf16 %v30
  %v35 = vld [vmem:[%s1] sm:$0xf]
  %v36 = vld [vmem:[%s1 + $0x4] sm:$0xf]
  %v37 = vld [vmem:[%s1 + $0x8] sm:$0xf]
  %v38 = vld [vmem:[%s1 + $0xc] sm:$0xf]
  %v39 = vld [vmem:[%s1 + $0x10] sm:$0xf]
  %v40 = vld [vmem:[%s1 + $0x14] sm:$0xf]
  %v41 = vld [vmem:[%s1 + $0x18] sm:$0xf]
  %v42 = vld [vmem:[%s1 + $0x1c] sm:$0xf]
  %v43 = vld [vmem:[%s2] sm:$0x1]
  %v45 = vperm.slane %v43, 0
  %v51 = vunpack.c.l.b16 %v27
  %v52 = vunpack.c.l.b16 %v28
  %v53 = vunpack.c.l.b16 %v29
  %v54 = vunpack.c.l.b16 %v30
  %v55 = vpack.c.b16 %v52, %v51
  %v56 = vpack.c.b16 %v54, %v53
  %v65 = vunpack.c.l.b16 %v35
  %v66 = vunpack.c.l.b16 %v36
  %v67 = vunpack.c.l.b16 %v37
  %v68 = vunpack.c.l.b16 %v38
  %v69 = vunpack.c.l.b16 %v39
  %v70 = vunpack.c.l.b16 %v40
  %v71 = vunpack.c.l.b16 %v41
  %v72 = vunpack.c.l.b16 %v42
  %v73 = vpack.c.b16 %v66, %v65
  %v74 = vpack.c.b16 %v68, %v67
  %v75 = vpack.c.b16 %v70, %v69
  %v76 = vpack.c.b16 %v72, %v71
  %vm81 = vcmask 523264
  %v83 = vsel %vm81, %v55, 0
  %v86 = vsel %vm81, %v56, 0
  %88 = vmatpush.bf16.msra.mxu0 0
  %89 = vmatpush.bf16.msra.mxu0 0
  %90 = vmatpush.bf16.msra.mxu0 0
  %91 = vmatpush.bf16.msra.mxu0 0
  %92 = vmatpush.bf16.msra.mxu0 %v76
  %93 = vmatpush.bf16.msra.mxu0 %v75
  %94 = vmatpush.bf16.msra.mxu0 %v74
  %95 = vmatpush.bf16.msra.mxu0 %v73
  %96 = vmatmul.bf16.gmra.mxu0 %v83
  %v97 = vpop.f32.mrf.mxu0
  %v98 = vadd.f32 %v45, %v97
  %v99 = vpop.f32.mrf.mxu0
  %v100 = vadd.f32 %v45, %v99
  %101 = vmatmul.bf16.gmra.mxu0 %v86
  %v102 = vpop.f32.mrf.mxu0
  %v103 = vadd.f32 %v45, %v102
  %v104 = vpop.f32.mrf.mxu0
  %v105 = vadd.f32 %v45, %v104
  %106 = vdwg.mxu0
  %v107 = vmax.f32 %v98, 0.0
  %v108 = vmax.f32 %v100, 0.0
  %v109 = vmax.f32 %v103, 0.0
  %v110 = vmax.f32 %v105, 0.0
  %v111 = vpack.c.bf16 %v108, %v107
  %v112 = vpack.c.bf16 %v110, %v109
  %v113 = vld [vmem:[%s3] sm:$0xf]
  %v114 = vld [vmem:[%s3 + $0x4] sm:$0xf]
  %v115 = vld [vmem:[%s3 + $0x8] sm:$0xf]
  %v116 = vld [vmem:[%s3 + $0xc] sm:$0xf]
  %v117 = vld [vmem:[%s3 + $0x10] sm:$0xf]
  %v118 = vld [vmem:[%s3 + $0x14] sm:$0xf]
  %v119 = vld [vmem:[%s3 + $0x18] sm:$0xf]
  %v120 = vld [vmem:[%s3 + $0x1c] sm:$0xf]
  %v121 = vld [vmem:[%s3 + $0x20] sm:$0xf]
  %v122 = vld [vmem:[%s3 + $0x24] sm:$0xf]
  %v123 = vld [vmem:[%s3 + $0x28] sm:$0xf]
  %v124 = vld [vmem:[%s3 + $0x2c] sm:$0xf]
  %v125 = vld [vmem:[%s3 + $0x30] sm:$0xf]
  %v126 = vld [vmem:[%s3 + $0x34] sm:$0xf]
  %v127 = vld [vmem:[%s3 + $0x38] sm:$0xf]
  %v128 = vld [vmem:[%s3 + $0x3c] sm:$0xf]
  %v129 = vld [vmem:[%s4] sm:$0x1]
  %v131 = vperm.slane %v129, 0
  %v149 = vunpack.c.l.b16 %v113
  %v150 = vunpack.c.l.b16 %v114
  %v151 = vunpack.c.l.b16 %v115
  %v152 = vunpack.c.l.b16 %v116
  %v153 = vunpack.c.l.b16 %v117
  %v154 = vunpack.c.l.b16 %v118
  %v155 = vunpack.c.l.b16 %v119
  %v156 = vunpack.c.l.b16 %v120
  %v157 = vunpack.c.l.b16 %v121
  %v158 = vunpack.c.l.b16 %v122
  %v159 = vunpack.c.l.b16 %v123
  %v160 = vunpack.c.l.b16 %v124
  %v161 = vunpack.c.l.b16 %v125
  %v162 = vunpack.c.l.b16 %v126
  %v163 = vunpack.c.l.b16 %v127
  %v164 = vunpack.c.l.b16 %v128
  %v165 = vpack.c.b16 %v150, %v149
  %v166 = vpack.c.b16 %v152, %v151
  %v167 = vpack.c.b16 %v154, %v153
  %v168 = vpack.c.b16 %v156, %v155
  %v169 = vpack.c.b16 %v158, %v157
  %v170 = vpack.c.b16 %v160, %v159
  %v171 = vpack.c.b16 %v162, %v161
  %v172 = vpack.c.b16 %v164, %v163
  %181 = vmatpush.bf16.msra.mxu0 %v172
  %182 = vmatpush.bf16.msra.mxu0 %v171
  %183 = vmatpush.bf16.msra.mxu0 %v170
  %184 = vmatpush.bf16.msra.mxu0 %v169
  %185 = vmatpush.bf16.msra.mxu0 %v168
  %186 = vmatpush.bf16.msra.mxu0 %v167
  %187 = vmatpush.bf16.msra.mxu0 %v166
  %188 = vmatpush.bf16.msra.mxu0 %v165
  %189 = vmatmul.bf16.gmra.mxu0 %v111
  %v190 = vpop.f32.mrf.mxu0
  %v191 = vadd.f32 %v131, %v190
  %v192 = vpop.f32.mrf.mxu0
  %v193 = vadd.f32 %v131, %v192
  %194 = vmatmul.bf16.gmra.mxu0 %v112
  %v195 = vpop.f32.mrf.mxu0
  %v196 = vadd.f32 %v131, %v195
  %v197 = vpop.f32.mrf.mxu0
  %v198 = vadd.f32 %v131, %v197
  %199 = vdwg.mxu0
  %v200 = vadd.f32 %v191, %v31
  %v201 = vadd.f32 %v193, %v32
  %v202 = vadd.f32 %v196, %v33
  %v203 = vadd.f32 %v198, %v34
  %v204 = vsel %vm81, %v200, 0.0
  %205 = vadd.xlane.f32.xlu0 %v204
  %v206 = vpop.xlane.xlu0 %205
  %v207 = vsel %vm81, %v201, 0.0
  %208 = vadd.xlane.f32.xlu0 %v207
  %v209 = vpop.xlane.xlu0 %208
  %v210 = vsel %vm81, %v202, 0.0
  %211 = vadd.xlane.f32.xlu0 %v210
  %v212 = vpop.xlane.xlu0 %211
  %vm213 = vcmask 519168
  %v214 = vsel %vm213, %v203, 0.0
  %215 = vadd.xlane.f32.xlu0 %v214
  %v216 = vpop.xlane.xlu0 %215
  %v217 = vrcp.pop 64.0
  %v218 = vmul.f32 64.0, %v217
  %v219 = vsub.f32 1.0, %v218
  %v220 = vmul.f32 %v217, %v219
  %v221 = vadd.f32 %v217, %v220
  %vm222 = vweird.f32 %v217
  %v223 = vsel %vm222, %v217, %v221
  %v224 = vmul.f32 %v206, %v223
  %v225 = vmul.f32 %v209, %v223
  %v226 = vmul.f32 %v212, %v223
  %v227 = vmul.f32 %v216, %v223
  %v228 = vsub.f32 %v200, %v224
  %v229 = vsub.f32 %v201, %v225
  %v230 = vsub.f32 %v202, %v226
  %v231 = vsub.f32 %v203, %v227
  %v232 = vmul.f32 %v228, %v228
  %v233 = vmul.f32 %v229, %v229
  %v234 = vmul.f32 %v230, %v230
  %v235 = vmul.f32 %v231, %v231
  %v236 = vsel %vm81, %v232, 0.0
  %237 = vadd.xlane.f32.xlu0 %v236
  %v238 = vpop.xlane.xlu0 %237
  %v239 = vsel %vm81, %v233, 0.0
  %240 = vadd.xlane.f32.xlu0 %v239
  %v241 = vpop.xlane.xlu0 %240
  %v242 = vsel %vm81, %v234, 0.0
  %243 = vadd.xlane.f32.xlu0 %v242
  %v244 = vpop.xlane.xlu0 %243
  %v245 = vsel %vm213, %v235, 0.0
  %246 = vadd.xlane.f32.xlu0 %v245
  %v247 = vpop.xlane.xlu0 %246
  %v248 = vmul.f32 %v238, %v223
  %v249 = vmul.f32 %v241, %v223
  %v250 = vmul.f32 %v244, %v223
  %v251 = vmul.f32 %v247, %v223
  %v252 = vadd.f32 %v248, 1e-05
  %v253 = vadd.f32 %v249, 1e-05
  %v254 = vadd.f32 %v250, 1e-05
  %v255 = vadd.f32 %v251, 1e-05
  %v256 = vrsqrt.pop %v252
  %v257 = vmul.f32 %v256, %v252
  %v258 = vmul.f32 %v257, %v256
  %v259 = vmul.f32 0.5, %v258
  %v260 = vsub.f32 1.5, %v259
  %v261 = vmul.f32 %v256, %v260
  %vm262 = vweird.f32 %v252
  %vm263 = vweird.f32 %v256
  %vm264 = vmor %vm262, %vm263
  %v265 = vsel %vm264, %v256, %v261
  %v266 = vrsqrt.pop %v253
  %v267 = vmul.f32 %v266, %v253
  %v268 = vmul.f32 %v267, %v266
  %v269 = vmul.f32 0.5, %v268
  %v270 = vsub.f32 1.5, %v269
  %v271 = vmul.f32 %v266, %v270
  %vm272 = vweird.f32 %v253
  %vm273 = vweird.f32 %v266
  %vm274 = vmor %vm272, %vm273
  %v275 = vsel %vm274, %v266, %v271
  %v276 = vrsqrt.pop %v254
  %v277 = vmul.f32 %v276, %v254
  %v278 = vmul.f32 %v277, %v276
  %v279 = vmul.f32 0.5, %v278
  %v280 = vsub.f32 1.5, %v279
  %v281 = vmul.f32 %v276, %v280
  %vm282 = vweird.f32 %v254
  %vm283 = vweird.f32 %v276
  %vm284 = vmor %vm282, %vm283
  %v285 = vsel %vm284, %v276, %v281
  %v286 = vrsqrt.pop %v255
  %v287 = vmul.f32 %v286, %v255
  %v288 = vmul.f32 %v287, %v286
  %v289 = vmul.f32 0.5, %v288
  %v290 = vsub.f32 1.5, %v289
  %v291 = vmul.f32 %v286, %v290
  %vm292 = vweird.f32 %v255
  %vm293 = vweird.f32 %v286
  %vm294 = vmor %vm292, %vm293
  %v295 = vsel %vm294, %v286, %v291
  %v296 = vmul.f32 %v228, %v265
  %v297 = vmul.f32 %v229, %v275
  %v298 = vmul.f32 %v230, %v285
  %v299 = vmul.f32 %v231, %v295
  %v300 = vld [vmem:[%s5] sm:$0x1]
  %v302 = vperm.slane %v300, 0
  %v304 = vmul.f32 %v296, %v302
  %v305 = vmul.f32 %v297, %v302
  %v306 = vmul.f32 %v298, %v302
  %v307 = vmul.f32 %v299, %v302
  %v308 = vld [vmem:[%s6] sm:$0x1]
  %v310 = vperm.slane %v308, 0
  %v312 = vadd.f32 %v304, %v310
  %v313 = vadd.f32 %v305, %v310
  %v314 = vadd.f32 %v306, %v310
  %v315 = vadd.f32 %v307, %v310
  %v316 = vpack.c.bf16 %v312, %v312
  %v317 = vpack.c.bf16 %v313, %v313
  %v318 = vpack.c.bf16 %v314, %v314
  %v319 = vpack.c.bf16 %v315, %v315
  %320 = vst.msk [vmem:[%s7] sm:$0xf] %vm213, %v316
  %321 = vst.msk [vmem:[%s7 + $0x4] sm:$0xf] %vm213, %v317
  %322 = vst.msk [vmem:[%s7 + $0x8] sm:$0xf] %vm213, %v318
  %vm323 = vcmask 517120
  %324 = vst.msk [vmem:[%s7 + $0xc] sm:$0x3] %vm323, %v319
  // Predicated region
  $region30: #{valle_forward.12} parent=0 // pred_check
    _
  $region31: #{valle_forward.12} parent=0 // pred_check_branch
    %326 = sbr.rel (0) target = $region33
  $region32: #{valle_forward.12} parent=0 // pred_region
    _
  $region33: #{valle_forward.12} parent=0 // pred_fallthru
    _
  // Predicated region
  $region34: #{valle_forward.12} parent=0 // pred_check
    _
  $region35: #{valle_forward.12} parent=0 // pred_check_branch
    %328 = sbr.rel (0) target = $region37
  $region36: #{valle_forward.12} parent=0 // pred_region
    _
  $region37: #{valle_forward.12} parent=0 // pred_fallthru
    _

// kernel: valle_forward.17
$region0: #{valle_forward.17}
  #allocation0 [shape = 'u32[]', space=smem, size = 0x4, offset = 0x4, fixed_abs, tag = 'smem constant byte address 0x4 - core index']
  #allocation1 [shape = 'u32[72,128]{1,0:T(1,128)}', space=vmem, size = 0x9000, scoped, tag = 'internal scratch']
  #allocation2 [shape = 'f32[16,128]{1,0:T(8,128)}', space=vmem, size = 0x2000, scoped, tag = 'scratch operand']
  %s0 = inlined_call_operand.vmem [shape: bf16[16,64], index: 0, kind: input, shape index: {}]
  %s1 = inlined_call_operand.vmem [shape: bf16[64,128], index: 1, kind: input, shape index: {}]
  %s2 = inlined_call_operand.vmem [shape: f32[1,128], index: 2, kind: input, shape index: {}]
  %s3 = inlined_call_operand.vmem [shape: f32[16,1], index: 3, kind: input, shape index: {}]
  %s4 = inlined_call_operand.vmem [shape: f32[16,128], index: 4, kind: output, shape index: {}]
  %s5 = sld [smem:[#allocation0]]
  $region34: #{valle_forward.17} parent=0
    _
  %s7 = ssub.s32 1, %s5
  %s8 = scalar_select 0, %s7, %s5
  // Predicated region
  $region2: #{valle_forward.17} parent=0 // pred_check
    _
  $region3: #{valle_forward.17} parent=0 // pred_check_branch
    %10 = sbr.rel (0) target = $region5
  $region4: #{valle_forward.17} parent=0 // pred_region
    _
  $region5: #{valle_forward.17} parent=0 // pred_fallthru
    _
  // Predicated region
  $region6: #{valle_forward.17} parent=0 // pred_check
    _
  $region7: #{valle_forward.17} parent=0 // pred_check_branch
    %12 = sbr.rel (0) target = $region9
  $region8: #{valle_forward.17} parent=0 // pred_region
    _
  $region9: #{valle_forward.17} parent=0 // pred_fallthru
    _
  // Predicated region
  $region10: #{valle_forward.17} parent=0 // pred_check
    _
  $region11: #{valle_forward.17} parent=0 // pred_check_branch
    %14 = sbr.rel (0) target = $region13
  $region12: #{valle_forward.17} parent=0 // pred_region
    _
  $region13: #{valle_forward.17} parent=0 // pred_fallthru
    _
  // Predicated region
  $region14: #{valle_forward.17} parent=0 // pred_check
    _
  $region15: #{valle_forward.17} parent=0 // pred_check_branch
    %16 = sbr.rel (0) target = $region17
  $region16: #{valle_forward.17} parent=0 // pred_region
    _
  $region17: #{valle_forward.17} parent=0 // pred_fallthru
    _
  %p18 = scmp.eq.s32.totalorder 0, 0
  // Predicated region
  $region18: #{valle_forward.17} parent=0 // pred_check
    %p19 = pneg %p18
  $region19: #{valle_forward.17} parent=0 // pred_check_branch
    %21 = sbr.rel (%p19) target = $region21
  $region20: #{valle_forward.17} parent=0 // pred_region
    %22 = vst [vmem:[#allocation2] sm:$0xff] 0.0
    %23 = vst [vmem:[#allocation2 + $0x8] sm:$0xff] 0.0
  $region21: #{valle_forward.17} parent=0 // pred_fallthru
    _
  %v24 = vld [vmem:[#allocation2] sm:$0xff]
  %v25 = vld [vmem:[#allocation2 + $0x8] sm:$0xff]
  %v26 = vld [vmem:[%s0] sm:$0xf]
  %v27 = vld [vmem:[%s0 + $0x4] sm:$0xf]
  %v28 = vld [vmem:[%s1] sm:$0xf]
  %v29 = vld [vmem:[%s1 + $0x4] sm:$0xf]
  %v30 = vld [vmem:[%s1 + $0x8] sm:$0xf]
  %v31 = vld [vmem:[%s1 + $0xc] sm:$0xf]
  %v32 = vld [vmem:[%s1 + $0x10] sm:$0xf]
  %v33 = vld [vmem:[%s1 + $0x14] sm:$0xf]
  %v34 = vld [vmem:[%s1 + $0x18] sm:$0xf]
  %v35 = vld [vmem:[%s1 + $0x1c] sm:$0xf]
  %v38 = vunpack.c.l.b16 %v26
  %v39 = vunpack.c.l.b16 %v27
  %v40 = vpack.c.b16 %v39, %v38
  %v49 = vunpack.c.l.b16 %v28
  %v50 = vunpack.c.l.b16 %v29
  %v51 = vunpack.c.l.b16 %v30
  %v52 = vunpack.c.l.b16 %v31
  %v53 = vunpack.c.l.b16 %v32
  %v54 = vunpack.c.l.b16 %v33
  %v55 = vunpack.c.l.b16 %v34
  %v56 = vunpack.c.l.b16 %v35
  %v57 = vpack.c.b16 %v50, %v49
  %v58 = vpack.c.b16 %v52, %v51
  %v59 = vpack.c.b16 %v54, %v53
  %v60 = vpack.c.b16 %v56, %v55
  %vm65 = vcmask 523264
  %v67 = vsel %vm65, %v40, 0
  %69 = vmatpush.bf16.msra.mxu0 0
  %70 = vmatpush.bf16.msra.mxu0 0
  %71 = vmatpush.bf16.msra.mxu0 0
  %72 = vmatpush.bf16.msra.mxu0 0
  %73 = vmatpush.bf16.msra.mxu0 %v60
  %74 = vmatpush.bf16.msra.mxu0 %v59
  %75 = vmatpush.bf16.msra.mxu0 %v58
  %76 = vmatpush.bf16.msra.mxu0 %v57
  %77 = vmatmul.bf16.gmra.mxu0 %v67
  %v78 = vpop.f32.mrf.mxu0
  %v79 = vadd.f32 0.0, %v78
  %v80 = vpop.f32.mrf.mxu0
  %v81 = vadd.f32 0.0, %v80
  %82 = vdwg.mxu0
  %v83 = vadd.f32 %v24, %v79
  %v84 = vadd.f32 %v25, %v81
  %85 = vst [vmem:[#allocation2] sm:$0xff] %v83
  %86 = vst [vmem:[#allocation2 + $0x8] sm:$0xff] %v84
  // Predicated region
  $region22: #{valle_forward.17} parent=0 // pred_check
    %p87 = pneg %p18
  $region23: #{valle_forward.17} parent=0 // pred_check_branch
    %89 = sbr.rel (%p87) target = $region25
  $region24: #{valle_forward.17} parent=0 // pred_region
    %v90 = vld [vmem:[#allocation2] sm:$0xff]
    %v91 = vld [vmem:[#allocation2 + $0x8] sm:$0xff]
    %v92 = vld [vmem:[%s2] sm:$0x1]
    %v94 = vperm.slane %v92, 0
    %v96 = vadd.f32 %v90, %v94
    %v97 = vadd.f32 %v91, %v94
    %v98 = vld [vmem:[%s3] sm:$0xff]
    %v99 = vld [vmem:[%s3 + $0x8] sm:$0xff]
    %101 = vset.pattern.permute.xlu0 0
    %102 = vperm.xlu0 %101, %v98
    %v103 = vpop.permute.xlu0 %102
    %106 = vset.pattern.permute.xlu0 0
    %107 = vperm.xlu0 %106, %v99
    %v108 = vpop.permute.xlu0 %107
    %v110 = vmul.f32 %v96, %v103
    %v111 = vmul.f32 %v97, %v108
    %112 = vst [vmem:[%s4] sm:$0xff] %v110
    %113 = vst [vmem:[%s4 + $0x8] sm:$0xff] %v111
  $region25: #{valle_forward.17} parent=0 // pred_fallthru
    _
  // Predicated region
  $region26: #{valle_forward.17} parent=0 // pred_check
    _
  $region27: #{valle_forward.17} parent=0 // pred_check_branch
    %115 = sbr.rel (0) target = $region29
  $region28: #{valle_forward.17} parent=0 // pred_region
    _
  $region29: #{valle_forward.17} parent=0 // pred_fallthru
    _
  // Predicated region
  $region30: #{valle_forward.17} parent=0 // pred_check
    _
  $region31: #{valle_forward.17} parent=0 // pred_check_branch
    %117 = sbr.rel (0) target = $region33
  $region32: #{valle_forward.17} parent=0 // pred_region
    _
  $region33: #{valle_forward.17} parent=0 // pred_fallthru
    _

</llo_original>
